<compile_context>
chip_gen: v5e
topology: v5e:2x2
jax: 0.10.0
libtpu: 0.0.40
codegen_flags: <defaults>
</compile_context>

<pallas_src>
import functools
import math

import numpy as np
import jax
import jax.numpy as jnp
from jax.experimental import pallas as pl
from jax.experimental.pallas import tpu as pltpu

EPS = 1e-5


# ---------------------------------------------------------------------------
# Fused kernel: upsample + pad + concat + conv/BN/ReLU x2, all resident in VMEM.
# ---------------------------------------------------------------------------
def _up_fused_kernel(x1s_ref, x2s_ref, uw_ref, bh2_ref, b1a_ref, b1b_ref, b2_ref,
                     gsum_ref, gtile_ref, rmask_ref, bn_ref, o_ref,
                     p2_ref, p1_ref, mid_ref, *, n_valid, N, H, H1, Hp, padY):
    f32 = jnp.float32
    R = N * Hp
    rmask = rmask_ref[...]                                    # (R, 1) valid-row mask

    def mm(a, b):
        return jnp.dot(a, b, preferred_element_type=f32)

    def bn_relu(a, gamma, beta):
        # Training-mode BatchNorm over the n_valid real (n, y, x) positions via
        # masked sufficient statistics; scale/shift tiled with one stacked matmul.
        am = a * rmask                                        # mask guard rows
        s1 = jnp.sum(am, axis=0, keepdims=True)               # sum a      (1, W*Co)
        s2 = jnp.sum(am * a, axis=0, keepdims=True)           # sum a^2    (1, W*Co)
        st = mm(jnp.concatenate([s1, s2], axis=0), gsum_ref[...]) * (1.0 / n_valid)
        mean = st[0:1, :]                                     # (1, Co)
        var = st[1:2, :] - mean * mean                        # (1, Co), f32
        scale = gamma * jax.lax.rsqrt(var + EPS)              # EUP rsqrt
        shift = beta - scale * mean
        so = mm(jnp.concatenate([scale, shift], axis=0), gtile_ref[...])  # (2, W*Co)
        return jnp.maximum(a * so[0:1, :] + so[1:2, :], 0.0)

    # ---- stage guard-row-padded input slabs in VMEM scratch --------------------
    # Zero rows provide conv zero padding and the F.pad rows; zero lanes of x1w
    # (from the uw matrix) provide the F.pad columns.  No concat is materialized:
    # the x2 / upsampled-x1 halves live in separate slabs and conv1's weights are
    # split along Cin accordingly.
    p2_ref[...] = jnp.zeros_like(p2_ref)
    p1_ref[...] = jnp.zeros_like(p1_ref)
    mid_ref[...] = jnp.zeros_like(mid_ref)
    x1w = mm(x1s_ref[...], uw_ref[...])            # bilinear 2x W-upsample (+ padX)
    for n in range(N):                             # N is small & static -> unrolled
        p2_ref[pl.ds(n * Hp + 2, H), :] = x2s_ref[pl.ds(n * H, H), :]
        p1_ref[pl.ds(n * Hp + 2 + padY, 2 * H1), :] = mm(
            bh2_ref[...], x1w[n * H1:(n + 1) * H1, :])        # bilinear 2x H-upsample

    # ---- conv1: 3 ky taps as pl.ds-shifted views of the padded slabs; the kx
    # shift + channel mixing live in the banded weight matrices (MXU) ------------
    acc = None
    for ky in range(3):
        t = (mm(p2_ref[pl.ds(ky, R), :], b1a_ref[ky])         # x2 half of the concat
             + mm(p1_ref[pl.ds(ky, R), :], b1b_ref[ky]))      # upsampled-x1 half
        acc = t if acc is None else acc + t                   # (R, W*Co) f32
    y1 = bn_relu(acc, bn_ref[0:1, :], bn_ref[1:2, :])

    # Stage conv1's output the same way: only valid rows are written, so the guard
    # rows stay exactly zero (conv2's zero padding).
    for n in range(N):
        mid_ref[pl.ds(n * Hp + 2, H), :] = y1[n * Hp + 1:n * Hp + 1 + H, :]

    # ---- conv2 ------------------------------------------------------------------
    acc2 = None
    for ky in range(3):
        t = mm(mid_ref[pl.ds(ky, R), :], b2_ref[ky])
        acc2 = t if acc2 is None else acc2 + t
    y2 = bn_relu(acc2, bn_ref[2:3, :], bn_ref[3:4, :])

    # ---- drop guard rows with lane-dense sliced stores (no selection matmul) ----
    for n in range(N):
        o_ref[pl.ds(n * H, H), :] = y2[n * Hp + 1:n * Hp + 1 + H, :].astype(o_ref.dtype)


# ---------------------------------------------------------------------------
# Static helper matrices (shape-only -> baked as compile-time constants).
# ---------------------------------------------------------------------------
def _bilinear_matrix(in_size, out_offset, out_total):
    """(in_size, out_total); column out_offset+q holds align_corners=True bilinear
    weights of the 2x-upsampled sample q."""
    out_len = 2 * in_size
    m = np.zeros((in_size, out_total), np.float32)
    for q in range(out_len):
        if in_size == 1:
            m[0, out_offset + q] = 1.0
        else:
            pos = q * (in_size - 1) / (out_len - 1)
            lo = min(int(np.floor(pos)), in_size - 2)
            f = pos - lo
            m[lo, out_offset + q] += 1.0 - f
            m[lo + 1, out_offset + q] += f
    return m


def up_forward(x1, x2, params):
    """Up.forward.  x1: (N, C1, H1, W1), x2: (N, C2, H, W) NCHW; returns NCHW.

    NOTE: the NCHW<->slab transposes below are kept only because the module contract
    is NCHW; a chain of Up blocks should stay in the lane-dense (N*H, W*C) slab.
    """
    N, C1, H1, W1 = map(int, x1.shape)
    N2, C2, H, W = map(int, x2.shape)
    assert N == N2
    w1, w2 = params["w1"], params["w2"]
    Cin, Cout = int(w1.shape[2]), int(w1.shape[3])
    assert Cin == C1 + C2
    diffY, diffX = H - 2 * H1, W - 2 * W1
    # TODO(synk): negative diffY/diffX (cropping) not supported here.
    assert diffY >= 0 and diffX >= 0
    padY, padX = diffY // 2, diffX // 2
    Hp = H + 2                        # +2 guard rows per image (conv zero padding)
    R = N * Hp

    # Lane-dense padded output channel count: W*Cop is a multiple of 128.
    lane_q = 128 // math.gcd(W, 128)
    Cop = ((Cout + lane_q - 1) // lane_q) * lane_q
    WC1, WC2, WCop = W * C1, W * C2, W * Cop

    # ---- static interpolation / grouping matrices (numpy -> constants) ---------
    uw = np.kron(_bilinear_matrix(W1, padX, W),
                 np.eye(C1, dtype=np.float32))                 # (W1*C1, W*C1)
    bh2 = np.ascontiguousarray(_bilinear_matrix(H1, 0, 2 * H1).T)   # (2*H1, H1)
    eyeCo = np.eye(Cop, dtype=np.float32)
    gsum = np.kron(np.ones((W, 1), np.float32), eyeCo)         # (W*Cop, Cop)
    gtile = np.kron(np.ones((1, W), np.float32), eyeCo)        # (Cop, W*Cop)
    mrow = np.zeros((Hp, 1), np.float32)
    mrow[1:1 + H] = 1.0
    rmask = np.tile(mrow, (N, 1))                              # (R, 1)

    # ---- weight-dependent banded kx matrices (tiny at these shapes) ------------
    skx = np.stack([np.eye(W, k=1 - kx, dtype=np.float32) for kx in range(3)])

    def banded(w):  # w: (3, 3, C, co) HWIO -> zero-pad co->Cop -> (3, W*C, W*Cop)
        w = jnp.asarray(w, jnp.float32)
        c, co = int(w.shape[2]), int(w.shape[3])
        if co < Cop:
            w = jnp.pad(w, ((0, 0), (0, 0), (0, 0), (0, Cop - co)))
        return jnp.einsum('xpq,yxco->ypcqo', jnp.asarray(skx), w).reshape(
            3, W * c, W * Cop)

    b1a = banded(w1[:, :, :C2, :])        # concat puts x2 channels first
    b1b = banded(w1[:, :, C2:, :])        # then the upsampled-x1 channels
    b2 = banded(jnp.pad(jnp.asarray(w2, jnp.float32),
                        ((0, 0), (0, 0), (0, Cop - Cout), (0, 0))))
    # NOTE: conv biases (params["b1"], params["b2"]) cancel exactly under
    # training-mode BatchNorm, so the kernel never needs them.

    def padc(v):
        return jnp.pad(jnp.asarray(v, jnp.float32), (0, Cop - Cout))

    bn = jnp.stack([padc(params["g1"]), padc(params["be1"]),
                    padc(params["g2"]), padc(params["be2"])])   # (4, Cop)

    # ---- inputs as lane-dense 2-D slabs ----------------------------------------
    x1s = jnp.transpose(x1, (0, 2, 3, 1)).reshape(N * H1, W1 * C1)
    x2s = jnp.transpose(x2, (0, 2, 3, 1)).reshape(N * H, W * C2)

    operands = (x1s, x2s, uw, bh2, b1a, b1b, b2, gsum, gtile, rmask, bn)

    flops = 2 * ((N * H1) * (W1 * C1) * WC1        # W-upsample (+padX)
                 + N * (2 * H1) * H1 * WC1         # per-image H-upsample
                 + 3 * R * WC2 * WCop              # conv1, x2 half
                 + 3 * R * WC1 * WCop              # conv1, upsampled-x1 half
                 + 3 * R * WCop * WCop)            # conv2
    operand_bytes = sum(int(np.prod(a.shape)) * 4 for a in operands)
    out_bytes = N * H * WCop * 4
    scratch_bytes = (R + 2) * (WC2 + WC1 + WCop) * 4
    footprint = operand_bytes + out_bytes + scratch_bytes
    vmem_limit = int(min(64 << 20, max(16 << 20, 2 * footprint + (4 << 20))))

    out_slab = pl.pallas_call(
        functools.partial(_up_fused_kernel, n_valid=float(N * H * W),
                          N=N, H=H, H1=H1, Hp=Hp, padY=padY),
        out_shape=jax.ShapeDtypeStruct((N * H, WCop), jnp.float32),
        scratch_shapes=[pltpu.VMEM((R + 2, WC2), jnp.float32),   # placed x2
                        pltpu.VMEM((R + 2, WC1), jnp.float32),   # placed upsampled x1
                        pltpu.VMEM((R + 2, WCop), jnp.float32)], # conv1 output (mid)
        cost_estimate=pl.CostEstimate(flops=int(flops),
                                      transcendentals=4 * Cop,
                                      bytes_accessed=int(operand_bytes + out_bytes)),
        compiler_params=pltpu.CompilerParams(vmem_limit_bytes=vmem_limit),
    )(*operands)

    # slab (N*H, W*Cop) -> drop padded channels -> NCHW
    out = out_slab.reshape(N, H, W, Cop)[:, :, :, :Cout]
    return jnp.transpose(out, (0, 3, 1, 2))


# ---------------------------------------------------------------------------
# Pure-JAX reference (bilinear -> pad -> concat -> conv/BN/ReLU x2), incl. bias.
# ---------------------------------------------------------------------------
def _resize_axis_align_corners(x, axis, out_size):
    in_size = x.shape[axis]
    if out_size == in_size:
        return x
    if in_size == 1:
        return jnp.repeat(x, out_size, axis=axis)
    pos = jnp.arange(out_size, dtype=jnp.float32) * (in_size - 1) / (out_size - 1)
    lo = jnp.clip(jnp.floor(pos).astype(jnp.int32), 0, in_size - 2)
    frac = pos - lo.astype(jnp.float32)
    shape = [1] * x.ndim
    shape[axis] = out_size
    frac = frac.reshape(shape)
    return jnp.take(x, lo, axis=axis) * (1.0 - frac) \
        + jnp.take(x, lo + 1, axis=axis) * frac


def _up_concat_ref(x1, x2):
    _, _, H1, W1 = x1.shape
    x1u = _resize_axis_align_corners(x1, 2, 2 * H1)
    x1u = _resize_axis_align_corners(x1u, 3, 2 * W1)
    diffY = x2.shape[2] - x1u.shape[2]
    diffX = x2.shape[3] - x1u.shape[3]
    x1u = jnp.pad(x1u, ((0, 0), (0, 0),
                        (diffY // 2, diffY - diffY // 2),
                        (diffX // 2, diffX - diffX // 2)))
    return jnp.concatenate([x2, x1u], axis=1)


def _conv_bn_relu_ref(x_nhwc, w, b, g, be):
    y = jax.lax.conv_general_dilated(
        x_nhwc, w, (1, 1), "SAME",
        dimension_numbers=("NHWC", "HWIO", "NHWC"),
        precision=jax.lax.Precision.HIGHEST)
    y = y + b.reshape(1, 1, 1, -1)
    mean = jnp.mean(y, axis=(0, 1, 2), keepdims=True)
    var = jnp.mean((y - mean) ** 2, axis=(0, 1, 2), keepdims=True)
    y = (y - mean) * jax.lax.rsqrt(var + EPS)
    y = y * g.reshape(1, 1, 1, -1) + be.reshape(1, 1, 1, -1)
    return jnp.maximum(y, 0.0)


def up_forward_ref(x1, x2, params):
    x = _up_concat_ref(x1, x2)
    x = jnp.transpose(x, (0, 2, 3, 1))
    y = _conv_bn_relu_ref(x, params["w1"], params["b1"], params["g1"], params["be1"])
    y = _conv_bn_relu_ref(y, params["w2"], params["b2"], params["g2"], params["be2"])
    return jnp.transpose(y, (0, 3, 1, 2))


if __name__ == "__main__":
    key = jax.random.PRNGKey(0)
    in_channels, out_channels = 8, 4          # Up(8, 4, bilinear=True)
    N, H2, W2 = 2, 16, 16

    keys = jax.random.split(key, 10)
    # x1: low-res feature map (in_channels // 2 channels), x2: skip connection.
    x1 = jax.random.normal(keys[0], (N, in_channels // 2, H2 // 2, W2 // 2), jnp.float32)
    x2 = jax.random.normal(keys[1], (N, in_channels // 2, H2, W2), jnp.float32)

    params = {
        # HWIO conv weights (deterministic synthetic init)
        "w1": 0.1 * jax.random.normal(keys[2], (3, 3, in_channels, out_channels), jnp.float32),
        "b1": 0.1 * jax.random.normal(keys[3], (out_channels,), jnp.float32),
        "g1": 1.0 + 0.1 * jax.random.normal(keys[4], (out_channels,), jnp.float32),
        "be1": 0.1 * jax.random.normal(keys[5], (out_channels,), jnp.float32),
        "w2": 0.1 * jax.random.normal(keys[6], (3, 3, out_channels, out_channels), jnp.float32),
        "b2": 0.1 * jax.random.normal(keys[7], (out_channels,), jnp.float32),
        "g2": 1.0 + 0.1 * jax.random.normal(keys[8], (out_channels,), jnp.float32),
        "be2": 0.1 * jax.random.normal(keys[9], (out_channels,), jnp.float32),
    }

    out = jax.block_until_ready(jax.jit(up_forward)(x1, x2, params))
    ref = jax.block_until_ready(up_forward_ref(x1, x2, params))

    assert out.shape == (N, out_channels, H2, W2), out.shape
    max_err = float(jnp.max(jnp.abs(out - ref)))
    assert jnp.allclose(out, ref, atol=2e-3, rtol=2e-3), f"max_err={max_err}"

    print("KERNEL_OK")
</pallas_src>

<mosaic_0001>
module attributes {stable_mosaic.version = 11 : i64} {
  func.func @_up_fused_kernel(%arg0: memref<16x32xf32, #tpu.memory_space<vmem>>, %arg1: memref<32x64xf32, #tpu.memory_space<vmem>>, %arg2: memref<32x64xf32, #tpu.memory_space<vmem>>, %arg3: memref<16x8xf32, #tpu.memory_space<vmem>>, %arg4: memref<3x64x128xf32, #tpu.memory_space<vmem>>, %arg5: memref<3x64x128xf32, #tpu.memory_space<vmem>>, %arg6: memref<3x128x128xf32, #tpu.memory_space<vmem>>, %arg7: memref<128x8xf32, #tpu.memory_space<vmem>>, %arg8: memref<8x128xf32, #tpu.memory_space<vmem>>, %arg9: memref<36x1xf32, #tpu.memory_space<vmem>>, %arg10: memref<4x8xf32, #tpu.memory_space<vmem>>, %arg11: memref<32x128xf32, #tpu.memory_space<vmem>>, %arg12: memref<38x64xf32, #tpu.memory_space<vmem>>, %arg13: memref<38x64xf32, #tpu.memory_space<vmem>>, %arg14: memref<38x128xf32, #tpu.memory_space<vmem>>) attributes {dimension_semantics = [], scalar_prefetch = 0 : i64, scratch_operands = 3 : i64, tpu.core_type = #tpu.core_type<tc>} {
    %c0 = arith.constant 0 : index
    %c0_0 = arith.constant 0 : index
    %0 = vector.load %arg9[%c0, %c0_0] : memref<36x1xf32, #tpu.memory_space<vmem>>, vector<36x1xf32>
    %cst = arith.constant 0.000000e+00 : f32
    %1 = vector.broadcast %cst : f32 to vector<38x64xf32>
    %c0_1 = arith.constant 0 : index
    %c0_2 = arith.constant 0 : index
    %2 = vector.load %arg12[%c0_1, %c0_2] : memref<38x64xf32, #tpu.memory_space<vmem>>, vector<38x64xf32>
    tpu.vector_store %arg12[%c0_1, %c0_2], %1 {strides = array<i32>} : memref<38x64xf32, #tpu.memory_space<vmem>>, vector<38x64xf32>,
    %cst_3 = arith.constant 0.000000e+00 : f32
    %3 = vector.broadcast %cst_3 : f32 to vector<38x64xf32>
    %c0_4 = arith.constant 0 : index
    %c0_5 = arith.constant 0 : index
    %4 = vector.load %arg13[%c0_4, %c0_5] : memref<38x64xf32, #tpu.memory_space<vmem>>, vector<38x64xf32>
    tpu.vector_store %arg13[%c0_4, %c0_5], %3 {strides = array<i32>} : memref<38x64xf32, #tpu.memory_space<vmem>>, vector<38x64xf32>,
    %cst_6 = arith.constant 0.000000e+00 : f32
    %5 = vector.broadcast %cst_6 : f32 to vector<38x128xf32>
    %c0_7 = arith.constant 0 : index
    %c0_8 = arith.constant 0 : index
    %6 = vector.load %arg14[%c0_7, %c0_8] : memref<38x128xf32, #tpu.memory_space<vmem>>, vector<38x128xf32>
    tpu.vector_store %arg14[%c0_7, %c0_8], %5 {strides = array<i32>} : memref<38x128xf32, #tpu.memory_space<vmem>>, vector<38x128xf32>,
    %c0_9 = arith.constant 0 : index
    %c0_10 = arith.constant 0 : index
    %7 = vector.load %arg0[%c0_9, %c0_10] : memref<16x32xf32, #tpu.memory_space<vmem>>, vector<16x32xf32>
    %c0_11 = arith.constant 0 : index
    %c0_12 = arith.constant 0 : index
    %8 = vector.load %arg2[%c0_11, %c0_12] : memref<32x64xf32, #tpu.memory_space<vmem>>, vector<32x64xf32>
    %cst_13 = arith.constant dense<0.000000e+00> : vector<16x64xf32>
    %9 = tpu.matmul %7, %8, %cst_13 {dimension_numbers = #tpu.dot_dimension_numbers<[1], [0], [0], [1], [0, 0, 1, 1], [], []>} : vector<16x32xf32>, vector<32x64xf32>, vector<16x64xf32> -> vector<16x64xf32>
    %c0_14 = arith.constant 0 : index
    %c0_15 = arith.constant 0 : index
    %10 = vector.load %arg1[%c0_14, %c0_15] : memref<32x64xf32, #tpu.memory_space<vmem>>, vector<16x64xf32>
    %c2 = arith.constant 2 : index
    %c0_16 = arith.constant 0 : index
    %11 = vector.load %arg12[%c2, %c0_16] : memref<38x64xf32, #tpu.memory_space<vmem>>, vector<16x64xf32>
    tpu.vector_store %arg12[%c2, %c0_16], %10 {strides = array<i32>} : memref<38x64xf32, #tpu.memory_space<vmem>>, vector<16x64xf32>,
    %c0_17 = arith.constant 0 : index
    %c0_18 = arith.constant 0 : index
    %12 = vector.load %arg3[%c0_17, %c0_18] : memref<16x8xf32, #tpu.memory_space<vmem>>, vector<16x8xf32>
    %13 = vector.extract_strided_slice %9 {offsets = [0, 0], sizes = [8, 64], strides = [1, 1]} : vector<16x64xf32> to vector<8x64xf32>
    %cst_19 = arith.constant dense<0.000000e+00> : vector<16x64xf32>
    %14 = tpu.matmul %12, %13, %cst_19 {dimension_numbers = #tpu.dot_dimension_numbers<[1], [0], [0], [1], [0, 0, 1, 1], [], []>} : vector<16x8xf32>, vector<8x64xf32>, vector<16x64xf32> -> vector<16x64xf32>
    %c2_20 = arith.constant 2 : index
    %c0_21 = arith.constant 0 : index
    %15 = vector.load %arg13[%c2_20, %c0_21] : memref<38x64xf32, #tpu.memory_space<vmem>>, vector<16x64xf32>
    tpu.vector_store %arg13[%c2_20, %c0_21], %14 {strides = array<i32>} : memref<38x64xf32, #tpu.memory_space<vmem>>, vector<16x64xf32>,
    %c16 = arith.constant 16 : index
    %c0_22 = arith.constant 0 : index
    %16 = vector.load %arg1[%c16, %c0_22] : memref<32x64xf32, #tpu.memory_space<vmem>>, vector<16x64xf32>
    %c20 = arith.constant 20 : index
    %c0_23 = arith.constant 0 : index
    %17 = vector.load %arg12[%c20, %c0_23] : memref<38x64xf32, #tpu.memory_space<vmem>>, vector<16x64xf32>
    tpu.vector_store %arg12[%c20, %c0_23], %16 {strides = array<i32>} : memref<38x64xf32, #tpu.memory_space<vmem>>, vector<16x64xf32>,
    %c0_24 = arith.constant 0 : index
    %c0_25 = arith.constant 0 : index
    %18 = vector.load %arg3[%c0_24, %c0_25] : memref<16x8xf32, #tpu.memory_space<vmem>>, vector<16x8xf32>
    %19 = vector.extract_strided_slice %9 {offsets = [8, 0], sizes = [8, 64], strides = [1, 1]} : vector<16x64xf32> to vector<8x64xf32>
    %cst_26 = arith.constant dense<0.000000e+00> : vector<16x64xf32>
    %20 = tpu.matmul %18, %19, %cst_26 {dimension_numbers = #tpu.dot_dimension_numbers<[1], [0], [0], [1], [0, 0, 1, 1], [], []>} : vector<16x8xf32>, vector<8x64xf32>, vector<16x64xf32> -> vector<16x64xf32>
    %c20_27 = arith.constant 20 : index
    %c0_28 = arith.constant 0 : index
    %21 = vector.load %arg13[%c20_27, %c0_28] : memref<38x64xf32, #tpu.memory_space<vmem>>, vector<16x64xf32>
    tpu.vector_store %arg13[%c20_27, %c0_28], %20 {strides = array<i32>} : memref<38x64xf32, #tpu.memory_space<vmem>>, vector<16x64xf32>,
    %c0_29 = arith.constant 0 : index
    %c0_30 = arith.constant 0 : index
    %22 = vector.load %arg12[%c0_29, %c0_30] : memref<38x64xf32, #tpu.memory_space<vmem>>, vector<36x64xf32>
    %c0_31 = arith.constant 0 : index
    %c0_32 = arith.constant 0 : index
    %c0_33 = arith.constant 0 : index
    %23 = vector.load %arg4[%c0_31, %c0_32, %c0_33] : memref<3x64x128xf32, #tpu.memory_space<vmem>>, vector<1x64x128xf32>
    %24 = vector.shape_cast %23 : vector<1x64x128xf32> to vector<64x128xf32>
    %cst_34 = arith.constant dense<0.000000e+00> : vector<36x128xf32>
    %25 = tpu.matmul %22, %24, %cst_34 {dimension_numbers = #tpu.dot_dimension_numbers<[1], [0], [0], [1], [0, 0, 1, 1], [], []>} : vector<36x64xf32>, vector<64x128xf32>, vector<36x128xf32> -> vector<36x128xf32>
    %c0_35 = arith.constant 0 : index
    %c0_36 = arith.constant 0 : index
    %26 = vector.load %arg13[%c0_35, %c0_36] : memref<38x64xf32, #tpu.memory_space<vmem>>, vector<36x64xf32>
    %c0_37 = arith.constant 0 : index
    %c0_38 = arith.constant 0 : index
    %c0_39 = arith.constant 0 : index
    %27 = vector.load %arg5[%c0_37, %c0_38, %c0_39] : memref<3x64x128xf32, #tpu.memory_space<vmem>>, vector<1x64x128xf32>
    %28 = vector.shape_cast %27 : vector<1x64x128xf32> to vector<64x128xf32>
    %cst_40 = arith.constant dense<0.000000e+00> : vector<36x128xf32>
    %29 = tpu.matmul %26, %28, %cst_40 {dimension_numbers = #tpu.dot_dimension_numbers<[1], [0], [0], [1], [0, 0, 1, 1], [], []>} : vector<36x64xf32>, vector<64x128xf32>, vector<36x128xf32> -> vector<36x128xf32>
    %30 = arith.addf %25, %29 : vector<36x128xf32>
    %c1 = arith.constant 1 : index
    %c0_41 = arith.constant 0 : index
    %31 = vector.load %arg12[%c1, %c0_41] : memref<38x64xf32, #tpu.memory_space<vmem>>, vector<36x64xf32>
    %c1_42 = arith.constant 1 : index
    %c0_43 = arith.constant 0 : index
    %c0_44 = arith.constant 0 : index
    %32 = vector.load %arg4[%c1_42, %c0_43, %c0_44] : memref<3x64x128xf32, #tpu.memory_space<vmem>>, vector<1x64x128xf32>
    %33 = vector.shape_cast %32 : vector<1x64x128xf32> to vector<64x128xf32>
    %cst_45 = arith.constant dense<0.000000e+00> : vector<36x128xf32>
    %34 = tpu.matmul %31, %33, %cst_45 {dimension_numbers = #tpu.dot_dimension_numbers<[1], [0], [0], [1], [0, 0, 1, 1], [], []>} : vector<36x64xf32>, vector<64x128xf32>, vector<36x128xf32> -> vector<36x128xf32>
    %c1_46 = arith.constant 1 : index
    %c0_47 = arith.constant 0 : index
    %35 = vector.load %arg13[%c1_46, %c0_47] : memref<38x64xf32, #tpu.memory_space<vmem>>, vector<36x64xf32>
    %c1_48 = arith.constant 1 : index
    %c0_49 = arith.constant 0 : index
    %c0_50 = arith.constant 0 : index
    %36 = vector.load %arg5[%c1_48, %c0_49, %c0_50] : memref<3x64x128xf32, #tpu.memory_space<vmem>>, vector<1x64x128xf32>
    %37 = vector.shape_cast %36 : vector<1x64x128xf32> to vector<64x128xf32>
    %cst_51 = arith.constant dense<0.000000e+00> : vector<36x128xf32>
    %38 = tpu.matmul %35, %37, %cst_51 {dimension_numbers = #tpu.dot_dimension_numbers<[1], [0], [0], [1], [0, 0, 1, 1], [], []>} : vector<36x64xf32>, vector<64x128xf32>, vector<36x128xf32> -> vector<36x128xf32>
    %39 = arith.addf %34, %38 : vector<36x128xf32>
    %40 = arith.addf %30, %39 : vector<36x128xf32>
    %c2_52 = arith.constant 2 : index
    %c0_53 = arith.constant 0 : index
    %41 = vector.load %arg12[%c2_52, %c0_53] : memref<38x64xf32, #tpu.memory_space<vmem>>, vector<36x64xf32>
    %c2_54 = arith.constant 2 : index
    %c0_55 = arith.constant 0 : index
    %c0_56 = arith.constant 0 : index
    %42 = vector.load %arg4[%c2_54, %c0_55, %c0_56] : memref<3x64x128xf32, #tpu.memory_space<vmem>>, vector<1x64x128xf32>
    %43 = vector.shape_cast %42 : vector<1x64x128xf32> to vector<64x128xf32>
    %cst_57 = arith.constant dense<0.000000e+00> : vector<36x128xf32>
    %44 = tpu.matmul %41, %43, %cst_57 {dimension_numbers = #tpu.dot_dimension_numbers<[1], [0], [0], [1], [0, 0, 1, 1], [], []>} : vector<36x64xf32>, vector<64x128xf32>, vector<36x128xf32> -> vector<36x128xf32>
    %c2_58 = arith.constant 2 : index
    %c0_59 = arith.constant 0 : index
    %45 = vector.load %arg13[%c2_58, %c0_59] : memref<38x64xf32, #tpu.memory_space<vmem>>, vector<36x64xf32>
    %c2_60 = arith.constant 2 : index
    %c0_61 = arith.constant 0 : index
    %c0_62 = arith.constant 0 : index
    %46 = vector.load %arg5[%c2_60, %c0_61, %c0_62] : memref<3x64x128xf32, #tpu.memory_space<vmem>>, vector<1x64x128xf32>
    %47 = vector.shape_cast %46 : vector<1x64x128xf32> to vector<64x128xf32>
    %cst_63 = arith.constant dense<0.000000e+00> : vector<36x128xf32>
    %48 = tpu.matmul %45, %47, %cst_63 {dimension_numbers = #tpu.dot_dimension_numbers<[1], [0], [0], [1], [0, 0, 1, 1], [], []>} : vector<36x64xf32>, vector<64x128xf32>, vector<36x128xf32> -> vector<36x128xf32>
    %49 = arith.addf %44, %48 : vector<36x128xf32>
    %50 = arith.addf %40, %49 : vector<36x128xf32>
    %c0_64 = arith.constant 0 : index
    %c0_65 = arith.constant 0 : index
    %51 = vector.load %arg10[%c0_64, %c0_65] : memref<4x8xf32, #tpu.memory_space<vmem>>, vector<1x8xf32>
    %c1_66 = arith.constant 1 : index
    %c0_67 = arith.constant 0 : index
    %52 = vector.load %arg10[%c1_66, %c0_67] : memref<4x8xf32, #tpu.memory_space<vmem>>, vector<1x8xf32>
    %53 = vector.broadcast %0 : vector<36x1xf32> to vector<36x128xf32>
    %54 = arith.mulf %50, %53 : vector<36x128xf32>
    %cst_68 = arith.constant dense<0.000000e+00> : vector<128xf32>
    %55 = vector.multi_reduction <add>, %54, %cst_68 [0] : vector<36x128xf32> to vector<128xf32>
    %56 = vector.shape_cast %55 : vector<128xf32> to vector<1x128xf32>
    %57 = arith.mulf %54, %50 : vector<36x128xf32>
    %cst_69 = arith.constant dense<0.000000e+00> : vector<128xf32>
    %58 = vector.multi_reduction <add>, %57, %cst_69 [0] : vector<36x128xf32> to vector<128xf32>
    %59 = vector.shape_cast %58 : vector<128xf32> to vector<1x128xf32>
    %60 = tpu.concatenate %56, %59 in 0 : vector<1x128xf32>, vector<1x128xf32> -> vector<2x128xf32>
    %c0_70 = arith.constant 0 : index
    %c0_71 = arith.constant 0 : index
    %61 = vector.load %arg7[%c0_70, %c0_71] : memref<128x8xf32, #tpu.memory_space<vmem>>, vector<128x8xf32>
    %cst_72 = arith.constant dense<0.000000e+00> : vector<2x8xf32>
    %62 = tpu.matmul %60, %61, %cst_72 {dimension_numbers = #tpu.dot_dimension_numbers<[1], [0], [0], [1], [0, 0, 1, 1], [], []>} : vector<2x128xf32>, vector<128x8xf32>, vector<2x8xf32> -> vector<2x8xf32>
    %cst_73 = arith.constant 0.001953125 : f32
    %63 = vector.broadcast %cst_73 : f32 to vector<2x8xf32>
    %64 = arith.mulf %62, %63 : vector<2x8xf32>
    %65 = vector.extract_strided_slice %64 {offsets = [0, 0], sizes = [1, 8], strides = [1, 1]} : vector<2x8xf32> to vector<1x8xf32>
    %66 = vector.extract_strided_slice %64 {offsets = [1, 0], sizes = [1, 8], strides = [1, 1]} : vector<2x8xf32> to vector<1x8xf32>
    %67 = arith.mulf %65, %65 : vector<1x8xf32>
    %68 = arith.subf %66, %67 : vector<1x8xf32>
    %cst_74 = arith.constant 9.99999974E-6 : f32
    %69 = vector.broadcast %cst_74 : f32 to vector<1x8xf32>
    %70 = arith.addf %68, %69 : vector<1x8xf32>
    %71 = math.rsqrt %70 : vector<1x8xf32>
    %72 = arith.mulf %51, %71 : vector<1x8xf32>
    %73 = arith.mulf %72, %65 : vector<1x8xf32>
    %74 = arith.subf %52, %73 : vector<1x8xf32>
    %75 = tpu.concatenate %72, %74 in 0 : vector<1x8xf32>, vector<1x8xf32> -> vector<2x8xf32>
    %c0_75 = arith.constant 0 : index
    %c0_76 = arith.constant 0 : index
    %76 = vector.load %arg8[%c0_75, %c0_76] : memref<8x128xf32, #tpu.memory_space<vmem>>, vector<8x128xf32>
    %cst_77 = arith.constant dense<0.000000e+00> : vector<2x128xf32>
    %77 = tpu.matmul %75, %76, %cst_77 {dimension_numbers = #tpu.dot_dimension_numbers<[1], [0], [0], [1], [0, 0, 1, 1], [], []>} : vector<2x8xf32>, vector<8x128xf32>, vector<2x128xf32> -> vector<2x128xf32>
    %78 = vector.extract_strided_slice %77 {offsets = [0, 0], sizes = [1, 128], strides = [1, 1]} : vector<2x128xf32> to vector<1x128xf32>
    %79 = vector.broadcast %78 : vector<1x128xf32> to vector<36x128xf32>
    %80 = arith.mulf %50, %79 : vector<36x128xf32>
    %81 = vector.extract_strided_slice %77 {offsets = [1, 0], sizes = [1, 128], strides = [1, 1]} : vector<2x128xf32> to vector<1x128xf32>
    %82 = vector.broadcast %81 : vector<1x128xf32> to vector<36x128xf32>
    %83 = arith.addf %80, %82 : vector<36x128xf32>
    %cst_78 = arith.constant 0.000000e+00 : f32
    %84 = vector.broadcast %cst_78 : f32 to vector<36x128xf32>
    %85 = arith.maximumf %83, %84 : vector<36x128xf32>
    %86 = vector.extract_strided_slice %85 {offsets = [1, 0], sizes = [16, 128], strides = [1, 1]} : vector<36x128xf32> to vector<16x128xf32>
    %c2_79 = arith.constant 2 : index
    %c0_80 = arith.constant 0 : index
    %87 = vector.load %arg14[%c2_79, %c0_80] : memref<38x128xf32, #tpu.memory_space<vmem>>, vector<16x128xf32>
    tpu.vector_store %arg14[%c2_79, %c0_80], %86 {strides = array<i32>} : memref<38x128xf32, #tpu.memory_space<vmem>>, vector<16x128xf32>,
    %88 = vector.extract_strided_slice %85 {offsets = [19, 0], sizes = [16, 128], strides = [1, 1]} : vector<36x128xf32> to vector<16x128xf32>
    %c20_81 = arith.constant 20 : index
    %c0_82 = arith.constant 0 : index
    %89 = vector.load %arg14[%c20_81, %c0_82] : memref<38x128xf32, #tpu.memory_space<vmem>>, vector<16x128xf32>
    tpu.vector_store %arg14[%c20_81, %c0_82], %88 {strides = array<i32>} : memref<38x128xf32, #tpu.memory_space<vmem>>, vector<16x128xf32>,
    %c0_83 = arith.constant 0 : index
    %c0_84 = arith.constant 0 : index
    %90 = vector.load %arg14[%c0_83, %c0_84] : memref<38x128xf32, #tpu.memory_space<vmem>>, vector<36x128xf32>
    %c0_85 = arith.constant 0 : index
    %c0_86 = arith.constant 0 : index
    %c0_87 = arith.constant 0 : index
    %91 = vector.load %arg6[%c0_85, %c0_86, %c0_87] : memref<3x128x128xf32, #tpu.memory_space<vmem>>, vector<1x128x128xf32>
    %92 = vector.shape_cast %91 : vector<1x128x128xf32> to vector<128x128xf32>
    %cst_88 = arith.constant dense<0.000000e+00> : vector<36x128xf32>
    %93 = tpu.matmul %90, %92, %cst_88 {dimension_numbers = #tpu.dot_dimension_numbers<[1], [0], [0], [1], [0, 0, 1, 1], [], []>} : vector<36x128xf32>, vector<128x128xf32>, vector<36x128xf32> -> vector<36x128xf32>
    %c1_89 = arith.constant 1 : index
    %c0_90 = arith.constant 0 : index
    %94 = vector.load %arg14[%c1_89, %c0_90] : memref<38x128xf32, #tpu.memory_space<vmem>>, vector<36x128xf32>
    %c1_91 = arith.constant 1 : index
    %c0_92 = arith.constant 0 : index
    %c0_93 = arith.constant 0 : index
    %95 = vector.load %arg6[%c1_91, %c0_92, %c0_93] : memref<3x128x128xf32, #tpu.memory_space<vmem>>, vector<1x128x128xf32>
    %96 = vector.shape_cast %95 : vector<1x128x128xf32> to vector<128x128xf32>
    %cst_94 = arith.constant dense<0.000000e+00> : vector<36x128xf32>
    %97 = tpu.matmul %94, %96, %cst_94 {dimension_numbers = #tpu.dot_dimension_numbers<[1], [0], [0], [1], [0, 0, 1, 1], [], []>} : vector<36x128xf32>, vector<128x128xf32>, vector<36x128xf32> -> vector<36x128xf32>
    %98 = arith.addf %93, %97 : vector<36x128xf32>
    %c2_95 = arith.constant 2 : index
    %c0_96 = arith.constant 0 : index
    %99 = vector.load %arg14[%c2_95, %c0_96] : memref<38x128xf32, #tpu.memory_space<vmem>>, vector<36x128xf32>
    %c2_97 = arith.constant 2 : index
    %c0_98 = arith.constant 0 : index
    %c0_99 = arith.constant 0 : index
    %100 = vector.load %arg6[%c2_97, %c0_98, %c0_99] : memref<3x128x128xf32, #tpu.memory_space<vmem>>, vector<1x128x128xf32>
    %101 = vector.shape_cast %100 : vector<1x128x128xf32> to vector<128x128xf32>
    %cst_100 = arith.constant dense<0.000000e+00> : vector<36x128xf32>
    %102 = tpu.matmul %99, %101, %cst_100 {dimension_numbers = #tpu.dot_dimension_numbers<[1], [0], [0], [1], [0, 0, 1, 1], [], []>} : vector<36x128xf32>, vector<128x128xf32>, vector<36x128xf32> -> vector<36x128xf32>
    %103 = arith.addf %98, %102 : vector<36x128xf32>
    %c2_101 = arith.constant 2 : index
    %c0_102 = arith.constant 0 : index
    %104 = vector.load %arg10[%c2_101, %c0_102] : memref<4x8xf32, #tpu.memory_space<vmem>>, vector<1x8xf32>
    %c3 = arith.constant 3 : index
    %c0_103 = arith.constant 0 : index
    %105 = vector.load %arg10[%c3, %c0_103] : memref<4x8xf32, #tpu.memory_space<vmem>>, vector<1x8xf32>
    %106 = vector.broadcast %0 : vector<36x1xf32> to vector<36x128xf32>
    %107 = arith.mulf %103, %106 : vector<36x128xf32>
    %cst_104 = arith.constant dense<0.000000e+00> : vector<128xf32>
    %108 = vector.multi_reduction <add>, %107, %cst_104 [0] : vector<36x128xf32> to vector<128xf32>
    %109 = vector.shape_cast %108 : vector<128xf32> to vector<1x128xf32>
    %110 = arith.mulf %107, %103 : vector<36x128xf32>
    %cst_105 = arith.constant dense<0.000000e+00> : vector<128xf32>
    %111 = vector.multi_reduction <add>, %110, %cst_105 [0] : vector<36x128xf32> to vector<128xf32>
    %112 = vector.shape_cast %111 : vector<128xf32> to vector<1x128xf32>
    %113 = tpu.concatenate %109, %112 in 0 : vector<1x128xf32>, vector<1x128xf32> -> vector<2x128xf32>
    %c0_106 = arith.constant 0 : index
    %c0_107 = arith.constant 0 : index
    %114 = vector.load %arg7[%c0_106, %c0_107] : memref<128x8xf32, #tpu.memory_space<vmem>>, vector<128x8xf32>
    %cst_108 = arith.constant dense<0.000000e+00> : vector<2x8xf32>
    %115 = tpu.matmul %113, %114, %cst_108 {dimension_numbers = #tpu.dot_dimension_numbers<[1], [0], [0], [1], [0, 0, 1, 1], [], []>} : vector<2x128xf32>, vector<128x8xf32>, vector<2x8xf32> -> vector<2x8xf32>
    %cst_109 = arith.constant 0.001953125 : f32
    %116 = vector.broadcast %cst_109 : f32 to vector<2x8xf32>
    %117 = arith.mulf %115, %116 : vector<2x8xf32>
    %118 = vector.extract_strided_slice %117 {offsets = [0, 0], sizes = [1, 8], strides = [1, 1]} : vector<2x8xf32> to vector<1x8xf32>
    %119 = vector.extract_strided_slice %117 {offsets = [1, 0], sizes = [1, 8], strides = [1, 1]} : vector<2x8xf32> to vector<1x8xf32>
    %120 = arith.mulf %118, %118 : vector<1x8xf32>
    %121 = arith.subf %119, %120 : vector<1x8xf32>
    %cst_110 = arith.constant 9.99999974E-6 : f32
    %122 = vector.broadcast %cst_110 : f32 to vector<1x8xf32>
    %123 = arith.addf %121, %122 : vector<1x8xf32>
    %124 = math.rsqrt %123 : vector<1x8xf32>
    %125 = arith.mulf %104, %124 : vector<1x8xf32>
    %126 = arith.mulf %125, %118 : vector<1x8xf32>
    %127 = arith.subf %105, %126 : vector<1x8xf32>
    %128 = tpu.concatenate %125, %127 in 0 : vector<1x8xf32>, vector<1x8xf32> -> vector<2x8xf32>
    %c0_111 = arith.constant 0 : index
    %c0_112 = arith.constant 0 : index
    %129 = vector.load %arg8[%c0_111, %c0_112] : memref<8x128xf32, #tpu.memory_space<vmem>>, vector<8x128xf32>
    %cst_113 = arith.constant dense<0.000000e+00> : vector<2x128xf32>
    %130 = tpu.matmul %128, %129, %cst_113 {dimension_numbers = #tpu.dot_dimension_numbers<[1], [0], [0], [1], [0, 0, 1, 1], [], []>} : vector<2x8xf32>, vector<8x128xf32>, vector<2x128xf32> -> vector<2x128xf32>
    %131 = vector.extract_strided_slice %130 {offsets = [0, 0], sizes = [1, 128], strides = [1, 1]} : vector<2x128xf32> to vector<1x128xf32>
    %132 = vector.broadcast %131 : vector<1x128xf32> to vector<36x128xf32>
    %133 = arith.mulf %103, %132 : vector<36x128xf32>
    %134 = vector.extract_strided_slice %130 {offsets = [1, 0], sizes = [1, 128], strides = [1, 1]} : vector<2x128xf32> to vector<1x128xf32>
    %135 = vector.broadcast %134 : vector<1x128xf32> to vector<36x128xf32>
    %136 = arith.addf %133, %135 : vector<36x128xf32>
    %cst_114 = arith.constant 0.000000e+00 : f32
    %137 = vector.broadcast %cst_114 : f32 to vector<36x128xf32>
    %138 = arith.maximumf %136, %137 : vector<36x128xf32>
    %139 = vector.extract_strided_slice %138 {offsets = [1, 0], sizes = [16, 128], strides = [1, 1]} : vector<36x128xf32> to vector<16x128xf32>
    %c0_115 = arith.constant 0 : index
    %c0_116 = arith.constant 0 : index
    %140 = vector.load %arg11[%c0_115, %c0_116] : memref<32x128xf32, #tpu.memory_space<vmem>>, vector<16x128xf32>
    tpu.vector_store %arg11[%c0_115, %c0_116], %139 {strides = array<i32>} : memref<32x128xf32, #tpu.memory_space<vmem>>, vector<16x128xf32>,
    %141 = vector.extract_strided_slice %138 {offsets = [19, 0], sizes = [16, 128], strides = [1, 1]} : vector<36x128xf32> to vector<16x128xf32>
    %c16_117 = arith.constant 16 : index
    %c0_118 = arith.constant 0 : index
    %142 = vector.load %arg11[%c16_117, %c0_118] : memref<32x128xf32, #tpu.memory_space<vmem>>, vector<16x128xf32>
    tpu.vector_store %arg11[%c16_117, %c0_118], %141 {strides = array<i32>} : memref<32x128xf32, #tpu.memory_space<vmem>>, vector<16x128xf32>,
    return
  }
}

</mosaic_0001>

<llo_original>
// kernel: up_forward.1
$region0: #{up_forward.1}
  #allocation0 [shape = 'u32[]', space=smem, size = 0x4, offset = 0x4, fixed_abs, tag = 'smem constant byte address 0x4 - core index']
  #allocation1 [shape = 'u32[72,128]{1,0:T(1,128)}', space=vmem, size = 0x9000, scoped, tag = 'internal scratch']
  #allocation2 [shape = 'f32[38,64]{1,0:T(8,128)}', space=vmem, size = 0x5000, scoped, tag = 'scratch operand']
  #allocation3 [shape = 'f32[38,64]{1,0:T(8,128)}', space=vmem, size = 0x5000, scoped, tag = 'scratch operand']
  #allocation4 [shape = 'f32[38,128]{1,0:T(8,128)}', space=vmem, size = 0x5000, scoped, tag = 'scratch operand']
  %s0 = inlined_call_operand.vmem [shape: f32[16,32], index: 0, kind: input, shape index: {}]
  %s1 = inlined_call_operand.vmem [shape: f32[32,64], index: 1, kind: input, shape index: {}]
  %s2 = inlined_call_operand.vmem [shape: f32[32,64], index: 2, kind: input, shape index: {}]
  %s3 = inlined_call_operand.vmem [shape: f32[16,8], index: 3, kind: input, shape index: {}]
  %s4 = inlined_call_operand.vmem [shape: f32[3,64,128], index: 4, kind: input, shape index: {}]
  %s5 = inlined_call_operand.vmem [shape: f32[3,64,128], index: 5, kind: input, shape index: {}]
  %s6 = inlined_call_operand.vmem [shape: f32[3,128,128], index: 6, kind: input, shape index: {}]
  %s7 = inlined_call_operand.vmem [shape: f32[128,8], index: 7, kind: input, shape index: {}]
  %s8 = inlined_call_operand.vmem [shape: f32[8,128], index: 8, kind: input, shape index: {}]
  %s9 = inlined_call_operand.vmem [shape: f32[36,1], index: 9, kind: input, shape index: {}]
  %s10 = inlined_call_operand.vmem [shape: f32[4,8], index: 10, kind: input, shape index: {}]
  %s11 = inlined_call_operand.vmem [shape: f32[32,128], index: 11, kind: output, shape index: {}]
  %s12 = sld [smem:[#allocation0]]
  $region54: #{up_forward.1} parent=0
    _
  %s14 = ssub.s32 1, %s12
  %s15 = scalar_select 0, %s14, %s12
  // Predicated region
  $region2: #{up_forward.1} parent=0 // pred_check
    _
  $region3: #{up_forward.1} parent=0 // pred_check_branch
    %17 = sbr.rel (0) target = $region5
  $region4: #{up_forward.1} parent=0 // pred_region
    _
  $region5: #{up_forward.1} parent=0 // pred_fallthru
    _
  // Predicated region
  $region6: #{up_forward.1} parent=0 // pred_check
    _
  $region7: #{up_forward.1} parent=0 // pred_check_branch
    %19 = sbr.rel (0) target = $region9
  $region8: #{up_forward.1} parent=0 // pred_region
    _
  $region9: #{up_forward.1} parent=0 // pred_fallthru
    _
  // Predicated region
  $region10: #{up_forward.1} parent=0 // pred_check
    _
  $region11: #{up_forward.1} parent=0 // pred_check_branch
    %21 = sbr.rel (0) target = $region13
  $region12: #{up_forward.1} parent=0 // pred_region
    _
  $region13: #{up_forward.1} parent=0 // pred_fallthru
    _
  // Predicated region
  $region14: #{up_forward.1} parent=0 // pred_check
    _
  $region15: #{up_forward.1} parent=0 // pred_check_branch
    %23 = sbr.rel (0) target = $region17
  $region16: #{up_forward.1} parent=0 // pred_region
    _
  $region17: #{up_forward.1} parent=0 // pred_fallthru
    _
  // Predicated region
  $region18: #{up_forward.1} parent=0 // pred_check
    _
  $region19: #{up_forward.1} parent=0 // pred_check_branch
    %25 = sbr.rel (0) target = $region21
  $region20: #{up_forward.1} parent=0 // pred_region
    _
  $region21: #{up_forward.1} parent=0 // pred_fallthru
    _
  // Predicated region
  $region22: #{up_forward.1} parent=0 // pred_check
    _
  $region23: #{up_forward.1} parent=0 // pred_check_branch
    %27 = sbr.rel (0) target = $region25
  $region24: #{up_forward.1} parent=0 // pred_region
    _
  $region25: #{up_forward.1} parent=0 // pred_fallthru
    _
  // Predicated region
  $region26: #{up_forward.1} parent=0 // pred_check
    _
  $region27: #{up_forward.1} parent=0 // pred_check_branch
    %29 = sbr.rel (0) target = $region29
  $region28: #{up_forward.1} parent=0 // pred_region
    _
  $region29: #{up_forward.1} parent=0 // pred_fallthru
    _
  // Predicated region
  $region30: #{up_forward.1} parent=0 // pred_check
    _
  $region31: #{up_forward.1} parent=0 // pred_check_branch
    %31 = sbr.rel (0) target = $region33
  $region32: #{up_forward.1} parent=0 // pred_region
    _
  $region33: #{up_forward.1} parent=0 // pred_fallthru
    _
  // Predicated region
  $region34: #{up_forward.1} parent=0 // pred_check
    _
  $region35: #{up_forward.1} parent=0 // pred_check_branch
    %33 = sbr.rel (0) target = $region37
  $region36: #{up_forward.1} parent=0 // pred_region
    _
  $region37: #{up_forward.1} parent=0 // pred_fallthru
    _
  // Predicated region
  $region38: #{up_forward.1} parent=0 // pred_check
    _
  $region39: #{up_forward.1} parent=0 // pred_check_branch
    %35 = sbr.rel (0) target = $region41
  $region40: #{up_forward.1} parent=0 // pred_region
    _
  $region41: #{up_forward.1} parent=0 // pred_fallthru
    _
  // Predicated region
  $region42: #{up_forward.1} parent=0 // pred_check
    _
  $region43: #{up_forward.1} parent=0 // pred_check_branch
    %37 = sbr.rel (0) target = $region45
  $region44: #{up_forward.1} parent=0 // pred_region
    _
  $region45: #{up_forward.1} parent=0 // pred_fallthru
    _
  %v38 = vld [vmem:[%s9] sm:$0xff]
  %v39 = vld [vmem:[%s9 + $0x8] sm:$0xff]
  %v40 = vld [vmem:[%s9 + $0x10] sm:$0xff]
  %v41 = vld [vmem:[%s9 + $0x18] sm:$0xff]
  %v42 = vld [vmem:[%s9 + $0x20] sm:$0xf]
  %vm43 = vcmask 523264
  %44 = vst.msk [vmem:[#allocation2] sm:$0xff] %vm43, 0.0
  %45 = vst.msk [vmem:[#allocation2 + $0x8] sm:$0xff] %vm43, 0.0
  %46 = vst.msk [vmem:[#allocation2 + $0x10] sm:$0xff] %vm43, 0.0
  %47 = vst.msk [vmem:[#allocation2 + $0x18] sm:$0xff] %vm43, 0.0
  %vm48 = vcmask 521216
  %49 = vst.msk [vmem:[#allocation2 + $0x20] sm:$0x3f] %vm48, 0.0
  %50 = vst.msk [vmem:[#allocation3] sm:$0xff] %vm43, 0.0
  %51 = vst.msk [vmem:[#allocation3 + $0x8] sm:$0xff] %vm43, 0.0
  %52 = vst.msk [vmem:[#allocation3 + $0x10] sm:$0xff] %vm43, 0.0
  %53 = vst.msk [vmem:[#allocation3 + $0x18] sm:$0xff] %vm43, 0.0
  %54 = vst.msk [vmem:[#allocation3 + $0x20] sm:$0x3f] %vm48, 0.0
  %55 = vst [vmem:[#allocation4] sm:$0xff] 0.0
  %56 = vst [vmem:[#allocation4 + $0x8] sm:$0xff] 0.0
  %57 = vst [vmem:[#allocation4 + $0x10] sm:$0xff] 0.0
  %58 = vst [vmem:[#allocation4 + $0x18] sm:$0xff] 0.0
  %59 = vst [vmem:[#allocation4 + $0x20] sm:$0x3f] 0.0
  %v60 = vld [vmem:[%s0] sm:$0xff]
  %v61 = vld [vmem:[%s0 + $0x8] sm:$0xff]
  %v62 = vld [vmem:[%s2] sm:$0xff]
  %v63 = vld [vmem:[%s2 + $0x8] sm:$0xff]
  %v64 = vld [vmem:[%s2 + $0x10] sm:$0xff]
  %v65 = vld [vmem:[%s2 + $0x18] sm:$0xff]
  %vm66 = vcmask 261120
  %v68 = vsel %vm66, %v60, 0
  %v71 = vsel %vm66, %v61, 0
  %73 = vmatpush.msra.mxu0 0.0
  %74 = vmatpush.msra.mxu0 0.0
  %75 = vmatpush.msra.mxu0 0.0
  %76 = vmatpush.msra.mxu0 0.0
  %77 = vmatpush.msra.mxu0 0.0
  %78 = vmatpush.msra.mxu0 0.0
  %79 = vmatpush.msra.mxu0 0.0
  %80 = vmatpush.msra.mxu0 0.0
  %81 = vmatpush.msra.mxu0 0.0
  %82 = vmatpush.msra.mxu0 0.0
  %83 = vmatpush.msra.mxu0 0.0
  %84 = vmatpush.msra.mxu0 0.0
  %85 = vmatpush.msra.mxu0 %v65
  %86 = vmatpush.msra.mxu0 %v64
  %87 = vmatpush.msra.mxu0 %v63
  %88 = vmatpush.msra.mxu0 %v62
  %89 = vmatmul.f32.gmra.mxu0 %v68
  %v90 = vpop.f32.mrf.mxu0
  %v91 = vadd.f32 0.0, %v90
  %92 = vmatmul.f32.gmra.mxu0 %v71
  %v93 = vpop.f32.mrf.mxu0
  %v94 = vadd.f32 0.0, %v93
  %95 = vdwg.mxu0
  %v96 = vld [vmem:[%s1] sm:$0xff]
  %v97 = vld [vmem:[%s1 + $0x8] sm:$0xff]
  %98 = vst.msk [vmem:[#allocation2 + $0x2] sm:$0xff] %vm43, %v96
  %99 = vst.msk [vmem:[#allocation2 + $0xa] sm:$0xff] %vm43, %v97
  %v100 = vld [vmem:[%s3] sm:$0xff]
  %v101 = vld [vmem:[%s3 + $0x8] sm:$0xff]
  %vm102 = vcmask 64512
  %v104 = vsel %vm102, %v100, 0
  %v107 = vsel %vm102, %v101, 0
  %109 = vmatpush.msra.mxu0 0.0
  %110 = vmatpush.msra.mxu0 0.0
  %111 = vmatpush.msra.mxu0 0.0
  %112 = vmatpush.msra.mxu0 0.0
  %113 = vmatpush.msra.mxu0 0.0
  %114 = vmatpush.msra.mxu0 0.0
  %115 = vmatpush.msra.mxu0 0.0
  %116 = vmatpush.msra.mxu0 0.0
  %117 = vmatpush.msra.mxu0 0.0
  %118 = vmatpush.msra.mxu0 0.0
  %119 = vmatpush.msra.mxu0 0.0
  %120 = vmatpush.msra.mxu0 0.0
  %121 = vmatpush.msra.mxu0 0.0
  %122 = vmatpush.msra.mxu0 0.0
  %123 = vmatpush.msra.mxu0 0.0
  %124 = vmatpush.msra.mxu0 %v91
  %125 = vmatmul.f32.gmra.mxu0 %v104
  %v126 = vpop.f32.mrf.mxu0
  %v127 = vadd.f32 0.0, %v126
  %128 = vmatmul.f32.gmra.mxu0 %v107
  %v129 = vpop.f32.mrf.mxu0
  %v130 = vadd.f32 0.0, %v129
  %131 = vdwg.mxu0
  %132 = vst.msk [vmem:[#allocation3 + $0x2] sm:$0xff] %vm43, %v127
  %133 = vst.msk [vmem:[#allocation3 + $0xa] sm:$0xff] %vm43, %v130
  %v134 = vld [vmem:[%s1 + $0x10] sm:$0xff]
  %v135 = vld [vmem:[%s1 + $0x18] sm:$0xff]
  %136 = vst.msk [vmem:[#allocation2 + $0x14] sm:$0xff] %vm43, %v134
  %137 = vst.msk [vmem:[#allocation2 + $0x1c] sm:$0xff] %vm43, %v135
  %v138 = vld [vmem:[%s3] sm:$0xff]
  %v139 = vld [vmem:[%s3 + $0x8] sm:$0xff]
  %v141 = vsel %vm102, %v138, 0
  %v144 = vsel %vm102, %v139, 0
  %146 = vmatpush.msra.mxu0 0.0
  %147 = vmatpush.msra.mxu0 0.0
  %148 = vmatpush.msra.mxu0 0.0
  %149 = vmatpush.msra.mxu0 0.0
  %150 = vmatpush.msra.mxu0 0.0
  %151 = vmatpush.msra.mxu0 0.0
  %152 = vmatpush.msra.mxu0 0.0
  %153 = vmatpush.msra.mxu0 0.0
  %154 = vmatpush.msra.mxu0 0.0
  %155 = vmatpush.msra.mxu0 0.0
  %156 = vmatpush.msra.mxu0 0.0
  %157 = vmatpush.msra.mxu0 0.0
  %158 = vmatpush.msra.mxu0 0.0
  %159 = vmatpush.msra.mxu0 0.0
  %160 = vmatpush.msra.mxu0 0.0
  %161 = vmatpush.msra.mxu0 %v94
  %162 = vmatmul.f32.gmra.mxu0 %v141
  %v163 = vpop.f32.mrf.mxu0
  %v164 = vadd.f32 0.0, %v163
  %165 = vmatmul.f32.gmra.mxu0 %v144
  %v166 = vpop.f32.mrf.mxu0
  %v167 = vadd.f32 0.0, %v166
  %168 = vdwg.mxu0
  %169 = vst.msk [vmem:[#allocation3 + $0x14] sm:$0xff] %vm43, %v164
  %170 = vst.msk [vmem:[#allocation3 + $0x1c] sm:$0xff] %vm43, %v167
  %v171 = vld [vmem:[#allocation2] sm:$0xff]
  %v172 = vld [vmem:[#allocation2 + $0x8] sm:$0xff]
  %v173 = vld [vmem:[#allocation2 + $0x10] sm:$0xff]
  %v174 = vld [vmem:[#allocation2 + $0x18] sm:$0xff]
  %v175 = vld [vmem:[#allocation2 + $0x20] sm:$0xf]
  %v176 = vld [vmem:[%s4] sm:$0xff]
  %v177 = vld [vmem:[%s4 + $0x8] sm:$0xff]
  %v178 = vld [vmem:[%s4 + $0x10] sm:$0xff]
  %v179 = vld [vmem:[%s4 + $0x18] sm:$0xff]
  %v180 = vld [vmem:[%s4 + $0x20] sm:$0xff]
  %v181 = vld [vmem:[%s4 + $0x28] sm:$0xff]
  %v182 = vld [vmem:[%s4 + $0x30] sm:$0xff]
  %v183 = vld [vmem:[%s4 + $0x38] sm:$0xff]
  %v184 = vld [vmem:[#allocation3] sm:$0xff]
  %v185 = vld [vmem:[#allocation3 + $0x8] sm:$0xff]
  %v186 = vld [vmem:[#allocation3 + $0x10] sm:$0xff]
  %v187 = vld [vmem:[#allocation3 + $0x18] sm:$0xff]
  %v188 = vld [vmem:[#allocation3 + $0x20] sm:$0xf]
  %v189 = vld [vmem:[%s5] sm:$0xff]
  %v190 = vld [vmem:[%s5 + $0x8] sm:$0xff]
  %v191 = vld [vmem:[%s5 + $0x10] sm:$0xff]
  %v192 = vld [vmem:[%s5 + $0x18] sm:$0xff]
  %v193 = vld [vmem:[%s5 + $0x20] sm:$0xff]
  %v194 = vld [vmem:[%s5 + $0x28] sm:$0xff]
  %v195 = vld [vmem:[%s5 + $0x30] sm:$0xff]
  %v196 = vld [vmem:[%s5 + $0x38] sm:$0xff]
  %v198 = vsel %vm43, %v184, 0
  %v201 = vsel %vm43, %v185, 0
  %v204 = vsel %vm43, %v186, 0
  %v207 = vsel %vm43, %v187, 0
  %v210 = vsel %vm43, %v188, 0
  %212 = vmatpush.msra.mxu0 0.0
  %213 = vmatpush.msra.mxu0 0.0
  %214 = vmatpush.msra.mxu0 0.0
  %215 = vmatpush.msra.mxu0 0.0
  %216 = vmatpush.msra.mxu0 0.0
  %217 = vmatpush.msra.mxu0 0.0
  %218 = vmatpush.msra.mxu0 0.0
  %219 = vmatpush.msra.mxu0 0.0
  %220 = vmatpush.msra.mxu0 %v196
  %221 = vmatpush.msra.mxu0 %v195
  %222 = vmatpush.msra.mxu0 %v194
  %223 = vmatpush.msra.mxu0 %v193
  %224 = vmatpush.msra.mxu0 %v192
  %225 = vmatpush.msra.mxu0 %v191
  %226 = vmatpush.msra.mxu0 %v190
  %227 = vmatpush.msra.mxu0 %v189
  %228 = vmatmul.f32.gmra.mxu0 %v198
  %v229 = vpop.f32.mrf.mxu0
  %v230 = vadd.f32 0.0, %v229
  %231 = vmatmul.f32.gmra.mxu0 %v201
  %v232 = vpop.f32.mrf.mxu0
  %v233 = vadd.f32 0.0, %v232
  %234 = vmatmul.f32.gmra.mxu0 %v204
  %v235 = vpop.f32.mrf.mxu0
  %v236 = vadd.f32 0.0, %v235
  %237 = vmatmul.f32.gmra.mxu0 %v207
  %v238 = vpop.f32.mrf.mxu0
  %v239 = vadd.f32 0.0, %v238
  %240 = vmatmul.f32.gmra.mxu0 %v210
  %v241 = vpop.f32.mrf.mxu0
  %v242 = vadd.f32 0.0, %v241
  %243 = vdwg.mxu0
  %v245 = vsel %vm43, %v171, 0
  %v248 = vsel %vm43, %v172, 0
  %v251 = vsel %vm43, %v173, 0
  %v254 = vsel %vm43, %v174, 0
  %v257 = vsel %vm43, %v175, 0
  %259 = vmatpush.msra.mxu0 0.0
  %260 = vmatpush.msra.mxu0 0.0
  %261 = vmatpush.msra.mxu0 0.0
  %262 = vmatpush.msra.mxu0 0.0
  %263 = vmatpush.msra.mxu0 0.0
  %264 = vmatpush.msra.mxu0 0.0
  %265 = vmatpush.msra.mxu0 0.0
  %266 = vmatpush.msra.mxu0 0.0
  %267 = vmatpush.msra.mxu0 %v183
  %268 = vmatpush.msra.mxu0 %v182
  %269 = vmatpush.msra.mxu0 %v181
  %270 = vmatpush.msra.mxu0 %v180
  %271 = vmatpush.msra.mxu0 %v179
  %272 = vmatpush.msra.mxu0 %v178
  %273 = vmatpush.msra.mxu0 %v177
  %274 = vmatpush.msra.mxu0 %v176
  %275 = vmatmul.f32.gmra.mxu0 %v245
  %v276 = vpop.f32.mrf.mxu0
  %v277 = vadd.f32 %v230, %v276
  %278 = vmatmul.f32.gmra.mxu0 %v248
  %v279 = vpop.f32.mrf.mxu0
  %v280 = vadd.f32 %v233, %v279
  %281 = vmatmul.f32.gmra.mxu0 %v251
  %v282 = vpop.f32.mrf.mxu0
  %v283 = vadd.f32 %v236, %v282
  %284 = vmatmul.f32.gmra.mxu0 %v254
  %v285 = vpop.f32.mrf.mxu0
  %v286 = vadd.f32 %v239, %v285
  %287 = vmatmul.f32.gmra.mxu0 %v257
  %v288 = vpop.f32.mrf.mxu0
  %v289 = vadd.f32 %v242, %v288
  %290 = vdwg.mxu0
  %v291 = vld [vmem:[#allocation2 + $0x1] sm:$0xff]
  %v292 = vld [vmem:[#allocation2 + $0x9] sm:$0xff]
  %v293 = vld [vmem:[#allocation2 + $0x11] sm:$0xff]
  %v294 = vld [vmem:[#allocation2 + $0x19] sm:$0xff]
  %v295 = vld [vmem:[#allocation2 + $0x21] sm:$0xf]
  %s296 = scalar_lea.vmem %s4, 64
  %v297 = vld [vmem:[%s296] sm:$0xff]
  %v298 = vld [vmem:[%s296 + $0x8] sm:$0xff]
  %v299 = vld [vmem:[%s296 + $0x10] sm:$0xff]
  %v300 = vld [vmem:[%s296 + $0x18] sm:$0xff]
  %v301 = vld [vmem:[%s296 + $0x20] sm:$0xff]
  %v302 = vld [vmem:[%s296 + $0x28] sm:$0xff]
  %v303 = vld [vmem:[%s296 + $0x30] sm:$0xff]
  %v304 = vld [vmem:[%s296 + $0x38] sm:$0xff]
  %v305 = vld [vmem:[#allocation3 + $0x1] sm:$0xff]
  %v306 = vld [vmem:[#allocation3 + $0x9] sm:$0xff]
  %v307 = vld [vmem:[#allocation3 + $0x11] sm:$0xff]
  %v308 = vld [vmem:[#allocation3 + $0x19] sm:$0xff]
  %v309 = vld [vmem:[#allocation3 + $0x21] sm:$0xf]
  %s310 = scalar_lea.vmem %s5, 64
  %v311 = vld [vmem:[%s310] sm:$0xff]
  %v312 = vld [vmem:[%s310 + $0x8] sm:$0xff]
  %v313 = vld [vmem:[%s310 + $0x10] sm:$0xff]
  %v314 = vld [vmem:[%s310 + $0x18] sm:$0xff]
  %v315 = vld [vmem:[%s310 + $0x20] sm:$0xff]
  %v316 = vld [vmem:[%s310 + $0x28] sm:$0xff]
  %v317 = vld [vmem:[%s310 + $0x30] sm:$0xff]
  %v318 = vld [vmem:[%s310 + $0x38] sm:$0xff]
  %v320 = vsel %vm43, %v305, 0
  %v323 = vsel %vm43, %v306, 0
  %v326 = vsel %vm43, %v307, 0
  %v329 = vsel %vm43, %v308, 0
  %v332 = vsel %vm43, %v309, 0
  %334 = vmatpush.msra.mxu0 0.0
  %335 = vmatpush.msra.mxu0 0.0
  %336 = vmatpush.msra.mxu0 0.0
  %337 = vmatpush.msra.mxu0 0.0
  %338 = vmatpush.msra.mxu0 0.0
  %339 = vmatpush.msra.mxu0 0.0
  %340 = vmatpush.msra.mxu0 0.0
  %341 = vmatpush.msra.mxu0 0.0
  %342 = vmatpush.msra.mxu0 %v318
  %343 = vmatpush.msra.mxu0 %v317
  %344 = vmatpush.msra.mxu0 %v316
  %345 = vmatpush.msra.mxu0 %v315
  %346 = vmatpush.msra.mxu0 %v314
  %347 = vmatpush.msra.mxu0 %v313
  %348 = vmatpush.msra.mxu0 %v312
  %349 = vmatpush.msra.mxu0 %v311
  %350 = vmatmul.f32.gmra.mxu0 %v320
  %v351 = vpop.f32.mrf.mxu0
  %v352 = vadd.f32 0.0, %v351
  %353 = vmatmul.f32.gmra.mxu0 %v323
  %v354 = vpop.f32.mrf.mxu0
  %v355 = vadd.f32 0.0, %v354
  %356 = vmatmul.f32.gmra.mxu0 %v326
  %v357 = vpop.f32.mrf.mxu0
  %v358 = vadd.f32 0.0, %v357
  %359 = vmatmul.f32.gmra.mxu0 %v329
  %v360 = vpop.f32.mrf.mxu0
  %v361 = vadd.f32 0.0, %v360
  %362 = vmatmul.f32.gmra.mxu0 %v332
  %v363 = vpop.f32.mrf.mxu0
  %v364 = vadd.f32 0.0, %v363
  %365 = vdwg.mxu0
  %v367 = vsel %vm43, %v291, 0
  %v370 = vsel %vm43, %v292, 0
  %v373 = vsel %vm43, %v293, 0
  %v376 = vsel %vm43, %v294, 0
  %v379 = vsel %vm43, %v295, 0
  %381 = vmatpush.msra.mxu0 0.0
  %382 = vmatpush.msra.mxu0 0.0
  %383 = vmatpush.msra.mxu0 0.0
  %384 = vmatpush.msra.mxu0 0.0
  %385 = vmatpush.msra.mxu0 0.0
  %386 = vmatpush.msra.mxu0 0.0
  %387 = vmatpush.msra.mxu0 0.0
  %388 = vmatpush.msra.mxu0 0.0
  %389 = vmatpush.msra.mxu0 %v304
  %390 = vmatpush.msra.mxu0 %v303
  %391 = vmatpush.msra.mxu0 %v302
  %392 = vmatpush.msra.mxu0 %v301
  %393 = vmatpush.msra.mxu0 %v300
  %394 = vmatpush.msra.mxu0 %v299
  %395 = vmatpush.msra.mxu0 %v298
  %396 = vmatpush.msra.mxu0 %v297
  %397 = vmatmul.f32.gmra.mxu0 %v367
  %v398 = vpop.f32.mrf.mxu0
  %v399 = vadd.f32 %v352, %v398
  %400 = vmatmul.f32.gmra.mxu0 %v370
  %v401 = vpop.f32.mrf.mxu0
  %v402 = vadd.f32 %v355, %v401
  %403 = vmatmul.f32.gmra.mxu0 %v373
  %v404 = vpop.f32.mrf.mxu0
  %v405 = vadd.f32 %v358, %v404
  %406 = vmatmul.f32.gmra.mxu0 %v376
  %v407 = vpop.f32.mrf.mxu0
  %v408 = vadd.f32 %v361, %v407
  %409 = vmatmul.f32.gmra.mxu0 %v379
  %v410 = vpop.f32.mrf.mxu0
  %v411 = vadd.f32 %v364, %v410
  %412 = vdwg.mxu0
  %v413 = vadd.f32 %v277, %v399
  %v414 = vadd.f32 %v280, %v402
  %v415 = vadd.f32 %v283, %v405
  %v416 = vadd.f32 %v286, %v408
  %v417 = vadd.f32 %v289, %v411
  %v418 = vld [vmem:[#allocation2 + $0x2] sm:$0xff]
  %v419 = vld [vmem:[#allocation2 + $0xa] sm:$0xff]
  %v420 = vld [vmem:[#allocation2 + $0x12] sm:$0xff]
  %v421 = vld [vmem:[#allocation2 + $0x1a] sm:$0xff]
  %v422 = vld [vmem:[#allocation2 + $0x22] sm:$0xf]
  %s423 = scalar_lea.vmem %s4, 128
  %v424 = vld [vmem:[%s423] sm:$0xff]
  %v425 = vld [vmem:[%s423 + $0x8] sm:$0xff]
  %v426 = vld [vmem:[%s423 + $0x10] sm:$0xff]
  %v427 = vld [vmem:[%s423 + $0x18] sm:$0xff]
  %v428 = vld [vmem:[%s423 + $0x20] sm:$0xff]
  %v429 = vld [vmem:[%s423 + $0x28] sm:$0xff]
  %v430 = vld [vmem:[%s423 + $0x30] sm:$0xff]
  %v431 = vld [vmem:[%s423 + $0x38] sm:$0xff]
  %v432 = vld [vmem:[#allocation3 + $0x2] sm:$0xff]
  %v433 = vld [vmem:[#allocation3 + $0xa] sm:$0xff]
  %v434 = vld [vmem:[#allocation3 + $0x12] sm:$0xff]
  %v435 = vld [vmem:[#allocation3 + $0x1a] sm:$0xff]
  %v436 = vld [vmem:[#allocation3 + $0x22] sm:$0xf]
  %s437 = scalar_lea.vmem %s5, 128
  %v438 = vld [vmem:[%s437] sm:$0xff]
  %v439 = vld [vmem:[%s437 + $0x8] sm:$0xff]
  %v440 = vld [vmem:[%s437 + $0x10] sm:$0xff]
  %v441 = vld [vmem:[%s437 + $0x18] sm:$0xff]
  %v442 = vld [vmem:[%s437 + $0x20] sm:$0xff]
  %v443 = vld [vmem:[%s437 + $0x28] sm:$0xff]
  %v444 = vld [vmem:[%s437 + $0x30] sm:$0xff]
  %v445 = vld [vmem:[%s437 + $0x38] sm:$0xff]
  %v447 = vsel %vm43, %v432, 0
  %v450 = vsel %vm43, %v433, 0
  %v453 = vsel %vm43, %v434, 0
  %v456 = vsel %vm43, %v435, 0
  %v459 = vsel %vm43, %v436, 0
  %461 = vmatpush.msra.mxu0 0.0
  %462 = vmatpush.msra.mxu0 0.0
  %463 = vmatpush.msra.mxu0 0.0
  %464 = vmatpush.msra.mxu0 0.0
  %465 = vmatpush.msra.mxu0 0.0
  %466 = vmatpush.msra.mxu0 0.0
  %467 = vmatpush.msra.mxu0 0.0
  %468 = vmatpush.msra.mxu0 0.0
  %469 = vmatpush.msra.mxu0 %v445
  %470 = vmatpush.msra.mxu0 %v444
  %471 = vmatpush.msra.mxu0 %v443
  %472 = vmatpush.msra.mxu0 %v442
  %473 = vmatpush.msra.mxu0 %v441
  %474 = vmatpush.msra.mxu0 %v440
  %475 = vmatpush.msra.mxu0 %v439
  %476 = vmatpush.msra.mxu0 %v438
  %477 = vmatmul.f32.gmra.mxu0 %v447
  %v478 = vpop.f32.mrf.mxu0
  %v479 = vadd.f32 0.0, %v478
  %480 = vmatmul.f32.gmra.mxu0 %v450
  %v481 = vpop.f32.mrf.mxu0
  %v482 = vadd.f32 0.0, %v481
  %483 = vmatmul.f32.gmra.mxu0 %v453
  %v484 = vpop.f32.mrf.mxu0
  %v485 = vadd.f32 0.0, %v484
  %486 = vmatmul.f32.gmra.mxu0 %v456
  %v487 = vpop.f32.mrf.mxu0
  %v488 = vadd.f32 0.0, %v487
  %489 = vmatmul.f32.gmra.mxu0 %v459
  %v490 = vpop.f32.mrf.mxu0
  %v491 = vadd.f32 0.0, %v490
  %492 = vdwg.mxu0
  %v494 = vsel %vm43, %v418, 0
  %v497 = vsel %vm43, %v419, 0
  %v500 = vsel %vm43, %v420, 0
  %v503 = vsel %vm43, %v421, 0
  %v506 = vsel %vm43, %v422, 0
  %508 = vmatpush.msra.mxu0 0.0
  %509 = vmatpush.msra.mxu0 0.0
  %510 = vmatpush.msra.mxu0 0.0
  %511 = vmatpush.msra.mxu0 0.0
  %512 = vmatpush.msra.mxu0 0.0
  %513 = vmatpush.msra.mxu0 0.0
  %514 = vmatpush.msra.mxu0 0.0
  %515 = vmatpush.msra.mxu0 0.0
  %516 = vmatpush.msra.mxu0 %v431
  %517 = vmatpush.msra.mxu0 %v430
  %518 = vmatpush.msra.mxu0 %v429
  %519 = vmatpush.msra.mxu0 %v428
  %520 = vmatpush.msra.mxu0 %v427
  %521 = vmatpush.msra.mxu0 %v426
  %522 = vmatpush.msra.mxu0 %v425
  %523 = vmatpush.msra.mxu0 %v424
  %524 = vmatmul.f32.gmra.mxu0 %v494
  %v525 = vpop.f32.mrf.mxu0
  %v526 = vadd.f32 %v479, %v525
  %527 = vmatmul.f32.gmra.mxu0 %v497
  %v528 = vpop.f32.mrf.mxu0
  %v529 = vadd.f32 %v482, %v528
  %530 = vmatmul.f32.gmra.mxu0 %v500
  %v531 = vpop.f32.mrf.mxu0
  %v532 = vadd.f32 %v485, %v531
  %533 = vmatmul.f32.gmra.mxu0 %v503
  %v534 = vpop.f32.mrf.mxu0
  %v535 = vadd.f32 %v488, %v534
  %536 = vmatmul.f32.gmra.mxu0 %v506
  %v537 = vpop.f32.mrf.mxu0
  %v538 = vadd.f32 %v491, %v537
  %539 = vdwg.mxu0
  %v540 = vadd.f32 %v413, %v526
  %v541 = vadd.f32 %v414, %v529
  %v542 = vadd.f32 %v415, %v532
  %v543 = vadd.f32 %v416, %v535
  %v544 = vadd.f32 %v417, %v538
  %v545 = vld [vmem:[%s10] sm:$0x1]
  %v546 = vld [vmem:[%s10 + $0x1] sm:$0x1]
  %548 = vset.pattern.permute.xlu0 0
  %549 = vperm.xlu0 %548, %v38
  %v550 = vpop.permute.xlu0 %549
  %553 = vset.pattern.permute.xlu0 0
  %554 = vperm.xlu0 %553, %v39
  %v555 = vpop.permute.xlu0 %554
  %558 = vset.pattern.permute.xlu0 0
  %559 = vperm.xlu0 %558, %v40
  %v560 = vpop.permute.xlu0 %559
  %563 = vset.pattern.permute.xlu0 0
  %564 = vperm.xlu0 %563, %v41
  %v565 = vpop.permute.xlu0 %564
  %568 = vset.pattern.permute.xlu0 0
  %569 = vperm.xlu0 %568, %v42
  %v570 = vpop.permute.xlu0 %569
  %v572 = vmul.f32 %v540, %v550
  %v573 = vmul.f32 %v541, %v555
  %v574 = vmul.f32 %v542, %v560
  %v575 = vmul.f32 %v543, %v565
  %v576 = vmul.f32 %v544, %v570
  %v577 = vadd.f32 %v572, %v573
  %v578 = vadd.f32 %v577, %v574
  %v579 = vadd.f32 %v578, %v575
  %vm580 = vcmask 1043456
  %v581 = vsel %vm580, %v576, 0.0
  %v582 = vadd.f32 %v579, %v581
  %v583 = vrot.slane %v582, 4
  %v584 = vadd.f32 %v582, %v583
  %v585 = vrot.slane %v584, 2
  %v586 = vadd.f32 %v584, %v585
  %v587 = vrot.slane %v586, 1
  %v588 = vadd.f32 %v586, %v587
  %v589 = vmul.f32 %v572, %v540
  %v590 = vmul.f32 %v573, %v541
  %v591 = vmul.f32 %v574, %v542
  %v592 = vmul.f32 %v575, %v543
  %v593 = vmul.f32 %v576, %v544
  %v594 = vadd.f32 %v589, %v590
  %v595 = vadd.f32 %v594, %v591
  %v596 = vadd.f32 %v595, %v592
  %v597 = vsel %vm580, %v593, 0.0
  %v598 = vadd.f32 %v596, %v597
  %v599 = vrot.slane %v598, 4
  %v600 = vadd.f32 %v598, %v599
  %v601 = vrot.slane %v600, 2
  %v602 = vadd.f32 %v600, %v601
  %v603 = vrot.slane %v602, 1
  %v604 = vadd.f32 %v602, %v603
  %vm605 = vcmask 1040384
  %v606 = vsel %vm605, %v588, %v604
  %v607 = vld [vmem:[%s7] sm:$0xff]
  %v608 = vld [vmem:[%s7 + $0x8] sm:$0xff]
  %v609 = vld [vmem:[%s7 + $0x10] sm:$0xff]
  %v610 = vld [vmem:[%s7 + $0x18] sm:$0xff]
  %v611 = vld [vmem:[%s7 + $0x20] sm:$0xff]
  %v612 = vld [vmem:[%s7 + $0x28] sm:$0xff]
  %v613 = vld [vmem:[%s7 + $0x30] sm:$0xff]
  %v614 = vld [vmem:[%s7 + $0x38] sm:$0xff]
  %v615 = vld [vmem:[%s7 + $0x40] sm:$0xff]
  %v616 = vld [vmem:[%s7 + $0x48] sm:$0xff]
  %v617 = vld [vmem:[%s7 + $0x50] sm:$0xff]
  %v618 = vld [vmem:[%s7 + $0x58] sm:$0xff]
  %v619 = vld [vmem:[%s7 + $0x60] sm:$0xff]
  %v620 = vld [vmem:[%s7 + $0x68] sm:$0xff]
  %v621 = vld [vmem:[%s7 + $0x70] sm:$0xff]
  %v622 = vld [vmem:[%s7 + $0x78] sm:$0xff]
  %623 = vmatpush.msra.mxu0 %v622
  %624 = vmatpush.msra.mxu0 %v621
  %625 = vmatpush.msra.mxu0 %v620
  %626 = vmatpush.msra.mxu0 %v619
  %627 = vmatpush.msra.mxu0 %v618
  %628 = vmatpush.msra.mxu0 %v617
  %629 = vmatpush.msra.mxu0 %v616
  %630 = vmatpush.msra.mxu0 %v615
  %631 = vmatpush.msra.mxu0 %v614
  %632 = vmatpush.msra.mxu0 %v613
  %633 = vmatpush.msra.mxu0 %v612
  %634 = vmatpush.msra.mxu0 %v611
  %635 = vmatpush.msra.mxu0 %v610
  %636 = vmatpush.msra.mxu0 %v609
  %637 = vmatpush.msra.mxu0 %v608
  %638 = vmatpush.msra.mxu0 %v607
  %639 = vmatmul.f32.gmra.mxu0 %v606
  %v640 = vpop.f32.mrf.mxu0
  %v641 = vadd.f32 0.0, %v640
  %642 = vdwg.mxu0
  %v643 = vmul.f32 %v641, 0.001953125
  %v644 = vmul.f32 %v643, %v643
  %v646 = vrot.slane %v644, 7
  %v648 = vsub.f32 %v643, %v646
  %v649 = vadd.f32 %v648, 1e-05
  %v650 = vrsqrt.pop %v649
  %v651 = vmul.f32 %v650, %v649
  %v652 = vmul.f32 %v651, %v650
  %v653 = vmul.f32 0.5, %v652
  %v654 = vsub.f32 1.5, %v653
  %v655 = vmul.f32 %v650, %v654
  %vm656 = vweird.f32 %v649
  %vm657 = vweird.f32 %v650
  %vm658 = vmor %vm656, %vm657
  %v659 = vsel %vm658, %v650, %v655
  %v661 = vrot.slane %v659, 1
  %v663 = vmul.f32 %v545, %v661
  %v664 = vmul.f32 %v663, %v643
  %v665 = vsub.f32 %v546, %v664
  %v667 = vrot.slane %v665, 7
  %v669 = vsel %vm605, %v663, %v667
  %v670 = vld [vmem:[%s8] sm:$0xff]
  %v672 = vsel %vm102, %v669, 0
  %674 = vmatpush.msra.mxu0 0.0
  %675 = vmatpush.msra.mxu0 0.0
  %676 = vmatpush.msra.mxu0 0.0
  %677 = vmatpush.msra.mxu0 0.0
  %678 = vmatpush.msra.mxu0 0.0
  %679 = vmatpush.msra.mxu0 0.0
  %680 = vmatpush.msra.mxu0 0.0
  %681 = vmatpush.msra.mxu0 0.0
  %682 = vmatpush.msra.mxu0 0.0
  %683 = vmatpush.msra.mxu0 0.0
  %684 = vmatpush.msra.mxu0 0.0
  %685 = vmatpush.msra.mxu0 0.0
  %686 = vmatpush.msra.mxu0 0.0
  %687 = vmatpush.msra.mxu0 0.0
  %688 = vmatpush.msra.mxu0 0.0
  %689 = vmatpush.msra.mxu0 %v670
  %690 = vmatmul.f32.gmra.mxu0 %v672
  %v691 = vpop.f32.mrf.mxu0
  %v692 = vadd.f32 0.0, %v691
  %693 = vdwg.mxu0
  %v694 = vperm.slane %v692, 0
  %v695 = vmul.f32 %v540, %v694
  %v696 = vmul.f32 %v541, %v694
  %v697 = vmul.f32 %v542, %v694
  %v698 = vmul.f32 %v543, %v694
  %v699 = vmul.f32 %v544, %v694
  %v700 = vperm.slane %v692, 1
  %v701 = vadd.f32 %v695, %v700
  %v702 = vadd.f32 %v696, %v700
  %v703 = vadd.f32 %v697, %v700
  %v704 = vadd.f32 %v698, %v700
  %v705 = vadd.f32 %v699, %v700
  %v706 = vmax.f32 %v701, 0.0
  %v707 = vmax.f32 %v702, 0.0
  %v708 = vmax.f32 %v703, 0.0
  %v709 = vmax.f32 %v704, 0.0
  %v710 = vmax.f32 %v705, 0.0
  %711 = vst [vmem:[#allocation4 + $0x1] sm:$0xfe] %v706
  %712 = vst [vmem:[#allocation4 + $0x9] sm:$0xff] %v707
  %713 = vst [vmem:[#allocation4 + $0x11] sm:$0x1] %v708
  %714 = vst [vmem:[#allocation4 + $0x11] sm:$0xf8] %v708
  %715 = vst [vmem:[#allocation4 + $0x19] sm:$0xff] %v709
  %716 = vst [vmem:[#allocation4 + $0x21] sm:$0x7] %v710
  %v717 = vld [vmem:[#allocation4] sm:$0xff]
  %v718 = vld [vmem:[#allocation4 + $0x8] sm:$0xff]
  %v719 = vld [vmem:[#allocation4 + $0x10] sm:$0xff]
  %v720 = vld [vmem:[#allocation4 + $0x18] sm:$0xff]
  %v721 = vld [vmem:[#allocation4 + $0x20] sm:$0xf]
  %v722 = vld [vmem:[%s6] sm:$0xff]
  %v723 = vld [vmem:[%s6 + $0x8] sm:$0xff]
  %v724 = vld [vmem:[%s6 + $0x10] sm:$0xff]
  %v725 = vld [vmem:[%s6 + $0x18] sm:$0xff]
  %v726 = vld [vmem:[%s6 + $0x20] sm:$0xff]
  %v727 = vld [vmem:[%s6 + $0x28] sm:$0xff]
  %v728 = vld [vmem:[%s6 + $0x30] sm:$0xff]
  %v729 = vld [vmem:[%s6 + $0x38] sm:$0xff]
  %v730 = vld [vmem:[%s6 + $0x40] sm:$0xff]
  %v731 = vld [vmem:[%s6 + $0x48] sm:$0xff]
  %v732 = vld [vmem:[%s6 + $0x50] sm:$0xff]
  %v733 = vld [vmem:[%s6 + $0x58] sm:$0xff]
  %v734 = vld [vmem:[%s6 + $0x60] sm:$0xff]
  %v735 = vld [vmem:[%s6 + $0x68] sm:$0xff]
  %v736 = vld [vmem:[%s6 + $0x70] sm:$0xff]
  %v737 = vld [vmem:[%s6 + $0x78] sm:$0xff]
  %v738 = vld [vmem:[#allocation4 + $0x1] sm:$0xff]
  %v739 = vld [vmem:[#allocation4 + $0x9] sm:$0xff]
  %v740 = vld [vmem:[#allocation4 + $0x11] sm:$0xff]
  %v741 = vld [vmem:[#allocation4 + $0x19] sm:$0xff]
  %v742 = vld [vmem:[#allocation4 + $0x21] sm:$0xf]
  %s743 = scalar_lea.vmem %s6, 128
  %v744 = vld [vmem:[%s743] sm:$0xff]
  %v745 = vld [vmem:[%s743 + $0x8] sm:$0xff]
  %v746 = vld [vmem:[%s743 + $0x10] sm:$0xff]
  %v747 = vld [vmem:[%s743 + $0x18] sm:$0xff]
  %v748 = vld [vmem:[%s743 + $0x20] sm:$0xff]
  %v749 = vld [vmem:[%s743 + $0x28] sm:$0xff]
  %v750 = vld [vmem:[%s743 + $0x30] sm:$0xff]
  %v751 = vld [vmem:[%s743 + $0x38] sm:$0xff]
  %v752 = vld [vmem:[%s743 + $0x40] sm:$0xff]
  %v753 = vld [vmem:[%s743 + $0x48] sm:$0xff]
  %v754 = vld [vmem:[%s743 + $0x50] sm:$0xff]
  %v755 = vld [vmem:[%s743 + $0x58] sm:$0xff]
  %v756 = vld [vmem:[%s743 + $0x60] sm:$0xff]
  %v757 = vld [vmem:[%s743 + $0x68] sm:$0xff]
  %v758 = vld [vmem:[%s743 + $0x70] sm:$0xff]
  %v759 = vld [vmem:[%s743 + $0x78] sm:$0xff]
  %760 = vmatpush.msra.mxu0 %v759
  %761 = vmatpush.msra.mxu0 %v758
  %762 = vmatpush.msra.mxu0 %v757
  %763 = vmatpush.msra.mxu0 %v756
  %764 = vmatpush.msra.mxu0 %v755
  %765 = vmatpush.msra.mxu0 %v754
  %766 = vmatpush.msra.mxu0 %v753
  %767 = vmatpush.msra.mxu0 %v752
  %768 = vmatpush.msra.mxu0 %v751
  %769 = vmatpush.msra.mxu0 %v750
  %770 = vmatpush.msra.mxu0 %v749
  %771 = vmatpush.msra.mxu0 %v748
  %772 = vmatpush.msra.mxu0 %v747
  %773 = vmatpush.msra.mxu0 %v746
  %774 = vmatpush.msra.mxu0 %v745
  %775 = vmatpush.msra.mxu0 %v744
  %776 = vmatmul.f32.gmra.mxu0 %v738
  %v777 = vpop.f32.mrf.mxu0
  %v778 = vadd.f32 0.0, %v777
  %779 = vmatmul.f32.gmra.mxu0 %v739
  %v780 = vpop.f32.mrf.mxu0
  %v781 = vadd.f32 0.0, %v780
  %782 = vmatmul.f32.gmra.mxu0 %v740
  %v783 = vpop.f32.mrf.mxu0
  %v784 = vadd.f32 0.0, %v783
  %785 = vmatmul.f32.gmra.mxu0 %v741
  %v786 = vpop.f32.mrf.mxu0
  %v787 = vadd.f32 0.0, %v786
  %788 = vmatmul.f32.gmra.mxu0 %v742
  %v789 = vpop.f32.mrf.mxu0
  %v790 = vadd.f32 0.0, %v789
  %791 = vdwg.mxu0
  %792 = vmatpush.msra.mxu0 %v737
  %793 = vmatpush.msra.mxu0 %v736
  %794 = vmatpush.msra.mxu0 %v735
  %795 = vmatpush.msra.mxu0 %v734
  %796 = vmatpush.msra.mxu0 %v733
  %797 = vmatpush.msra.mxu0 %v732
  %798 = vmatpush.msra.mxu0 %v731
  %799 = vmatpush.msra.mxu0 %v730
  %800 = vmatpush.msra.mxu0 %v729
  %801 = vmatpush.msra.mxu0 %v728
  %802 = vmatpush.msra.mxu0 %v727
  %803 = vmatpush.msra.mxu0 %v726
  %804 = vmatpush.msra.mxu0 %v725
  %805 = vmatpush.msra.mxu0 %v724
  %806 = vmatpush.msra.mxu0 %v723
  %807 = vmatpush.msra.mxu0 %v722
  %808 = vmatmul.f32.gmra.mxu0 %v717
  %v809 = vpop.f32.mrf.mxu0
  %v810 = vadd.f32 %v778, %v809
  %811 = vmatmul.f32.gmra.mxu0 %v718
  %v812 = vpop.f32.mrf.mxu0
  %v813 = vadd.f32 %v781, %v812
  %814 = vmatmul.f32.gmra.mxu0 %v719
  %v815 = vpop.f32.mrf.mxu0
  %v816 = vadd.f32 %v784, %v815
  %817 = vmatmul.f32.gmra.mxu0 %v720
  %v818 = vpop.f32.mrf.mxu0
  %v819 = vadd.f32 %v787, %v818
  %820 = vmatmul.f32.gmra.mxu0 %v721
  %v821 = vpop.f32.mrf.mxu0
  %v822 = vadd.f32 %v790, %v821
  %823 = vdwg.mxu0
  %v824 = vld [vmem:[#allocation4 + $0x2] sm:$0xff]
  %v825 = vld [vmem:[#allocation4 + $0xa] sm:$0xff]
  %v826 = vld [vmem:[#allocation4 + $0x12] sm:$0xff]
  %v827 = vld [vmem:[#allocation4 + $0x1a] sm:$0xff]
  %v828 = vld [vmem:[#allocation4 + $0x22] sm:$0xf]
  %s829 = scalar_lea.vmem %s6, 256
  %v830 = vld [vmem:[%s829] sm:$0xff]
  %v831 = vld [vmem:[%s829 + $0x8] sm:$0xff]
  %v832 = vld [vmem:[%s829 + $0x10] sm:$0xff]
  %v833 = vld [vmem:[%s829 + $0x18] sm:$0xff]
  %v834 = vld [vmem:[%s829 + $0x20] sm:$0xff]
  %v835 = vld [vmem:[%s829 + $0x28] sm:$0xff]
  %v836 = vld [vmem:[%s829 + $0x30] sm:$0xff]
  %v837 = vld [vmem:[%s829 + $0x38] sm:$0xff]
  %v838 = vld [vmem:[%s829 + $0x40] sm:$0xff]
  %v839 = vld [vmem:[%s829 + $0x48] sm:$0xff]
  %v840 = vld [vmem:[%s829 + $0x50] sm:$0xff]
  %v841 = vld [vmem:[%s829 + $0x58] sm:$0xff]
  %v842 = vld [vmem:[%s829 + $0x60] sm:$0xff]
  %v843 = vld [vmem:[%s829 + $0x68] sm:$0xff]
  %v844 = vld [vmem:[%s829 + $0x70] sm:$0xff]
  %v845 = vld [vmem:[%s829 + $0x78] sm:$0xff]
  %846 = vmatpush.msra.mxu0 %v845
  %847 = vmatpush.msra.mxu0 %v844
  %848 = vmatpush.msra.mxu0 %v843
  %849 = vmatpush.msra.mxu0 %v842
  %850 = vmatpush.msra.mxu0 %v841
  %851 = vmatpush.msra.mxu0 %v840
  %852 = vmatpush.msra.mxu0 %v839
  %853 = vmatpush.msra.mxu0 %v838
  %854 = vmatpush.msra.mxu0 %v837
  %855 = vmatpush.msra.mxu0 %v836
  %856 = vmatpush.msra.mxu0 %v835
  %857 = vmatpush.msra.mxu0 %v834
  %858 = vmatpush.msra.mxu0 %v833
  %859 = vmatpush.msra.mxu0 %v832
  %860 = vmatpush.msra.mxu0 %v831
  %861 = vmatpush.msra.mxu0 %v830
  %862 = vmatmul.f32.gmra.mxu0 %v824
  %v863 = vpop.f32.mrf.mxu0
  %v864 = vadd.f32 0.0, %v863
  %865 = vmatmul.f32.gmra.mxu0 %v825
  %v866 = vpop.f32.mrf.mxu0
  %v867 = vadd.f32 0.0, %v866
  %868 = vmatmul.f32.gmra.mxu0 %v826
  %v869 = vpop.f32.mrf.mxu0
  %v870 = vadd.f32 0.0, %v869
  %871 = vmatmul.f32.gmra.mxu0 %v827
  %v872 = vpop.f32.mrf.mxu0
  %v873 = vadd.f32 0.0, %v872
  %874 = vmatmul.f32.gmra.mxu0 %v828
  %v875 = vpop.f32.mrf.mxu0
  %v876 = vadd.f32 0.0, %v875
  %877 = vdwg.mxu0
  %v878 = vadd.f32 %v810, %v864
  %v879 = vadd.f32 %v813, %v867
  %v880 = vadd.f32 %v816, %v870
  %v881 = vadd.f32 %v819, %v873
  %v882 = vadd.f32 %v822, %v876
  %v883 = vld [vmem:[%s10 + $0x2] sm:$0x1]
  %v884 = vld [vmem:[%s10 + $0x3] sm:$0x1]
  %v885 = vmul.f32 %v878, %v550
  %v886 = vmul.f32 %v879, %v555
  %v887 = vmul.f32 %v880, %v560
  %v888 = vmul.f32 %v881, %v565
  %v889 = vmul.f32 %v882, %v570
  %v890 = vadd.f32 %v885, %v886
  %v891 = vadd.f32 %v890, %v887
  %v892 = vadd.f32 %v891, %v888
  %v893 = vsel %vm580, %v889, 0.0
  %v894 = vadd.f32 %v892, %v893
  %v895 = vrot.slane %v894, 4
  %v896 = vadd.f32 %v894, %v895
  %v897 = vrot.slane %v896, 2
  %v898 = vadd.f32 %v896, %v897
  %v899 = vrot.slane %v898, 1
  %v900 = vadd.f32 %v898, %v899
  %v901 = vmul.f32 %v885, %v878
  %v902 = vmul.f32 %v886, %v879
  %v903 = vmul.f32 %v887, %v880
  %v904 = vmul.f32 %v888, %v881
  %v905 = vmul.f32 %v889, %v882
  %v906 = vadd.f32 %v901, %v902
  %v907 = vadd.f32 %v906, %v903
  %v908 = vadd.f32 %v907, %v904
  %v909 = vsel %vm580, %v905, 0.0
  %v910 = vadd.f32 %v908, %v909
  %v911 = vrot.slane %v910, 4
  %v912 = vadd.f32 %v910, %v911
  %v913 = vrot.slane %v912, 2
  %v914 = vadd.f32 %v912, %v913
  %v915 = vrot.slane %v914, 1
  %v916 = vadd.f32 %v914, %v915
  %v917 = vsel %vm605, %v900, %v916
  %v918 = vld [vmem:[%s7] sm:$0xff]
  %v919 = vld [vmem:[%s7 + $0x8] sm:$0xff]
  %v920 = vld [vmem:[%s7 + $0x10] sm:$0xff]
  %v921 = vld [vmem:[%s7 + $0x18] sm:$0xff]
  %v922 = vld [vmem:[%s7 + $0x20] sm:$0xff]
  %v923 = vld [vmem:[%s7 + $0x28] sm:$0xff]
  %v924 = vld [vmem:[%s7 + $0x30] sm:$0xff]
  %v925 = vld [vmem:[%s7 + $0x38] sm:$0xff]
  %v926 = vld [vmem:[%s7 + $0x40] sm:$0xff]
  %v927 = vld [vmem:[%s7 + $0x48] sm:$0xff]
  %v928 = vld [vmem:[%s7 + $0x50] sm:$0xff]
  %v929 = vld [vmem:[%s7 + $0x58] sm:$0xff]
  %v930 = vld [vmem:[%s7 + $0x60] sm:$0xff]
  %v931 = vld [vmem:[%s7 + $0x68] sm:$0xff]
  %v932 = vld [vmem:[%s7 + $0x70] sm:$0xff]
  %v933 = vld [vmem:[%s7 + $0x78] sm:$0xff]
  %934 = vmatpush.msra.mxu0 %v933
  %935 = vmatpush.msra.mxu0 %v932
  %936 = vmatpush.msra.mxu0 %v931
  %937 = vmatpush.msra.mxu0 %v930
  %938 = vmatpush.msra.mxu0 %v929
  %939 = vmatpush.msra.mxu0 %v928
  %940 = vmatpush.msra.mxu0 %v927
  %941 = vmatpush.msra.mxu0 %v926
  %942 = vmatpush.msra.mxu0 %v925
  %943 = vmatpush.msra.mxu0 %v924
  %944 = vmatpush.msra.mxu0 %v923
  %945 = vmatpush.msra.mxu0 %v922
  %946 = vmatpush.msra.mxu0 %v921
  %947 = vmatpush.msra.mxu0 %v920
  %948 = vmatpush.msra.mxu0 %v919
  %949 = vmatpush.msra.mxu0 %v918
  %950 = vmatmul.f32.gmra.mxu0 %v917
  %v951 = vpop.f32.mrf.mxu0
  %v952 = vadd.f32 0.0, %v951
  %953 = vdwg.mxu0
  %v954 = vmul.f32 %v952, 0.001953125
  %v955 = vmul.f32 %v954, %v954
  %v957 = vrot.slane %v955, 7
  %v959 = vsub.f32 %v954, %v957
  %v960 = vadd.f32 %v959, 1e-05
  %v961 = vrsqrt.pop %v960
  %v962 = vmul.f32 %v961, %v960
  %v963 = vmul.f32 %v962, %v961
  %v964 = vmul.f32 0.5, %v963
  %v965 = vsub.f32 1.5, %v964
  %v966 = vmul.f32 %v961, %v965
  %vm967 = vweird.f32 %v960
  %vm968 = vweird.f32 %v961
  %vm969 = vmor %vm967, %vm968
  %v970 = vsel %vm969, %v961, %v966
  %v972 = vrot.slane %v970, 1
  %v974 = vmul.f32 %v883, %v972
  %v975 = vmul.f32 %v974, %v954
  %v976 = vsub.f32 %v884, %v975
  %v978 = vrot.slane %v976, 7
  %v980 = vsel %vm605, %v974, %v978
  %v981 = vld [vmem:[%s8] sm:$0xff]
  %v983 = vsel %vm102, %v980, 0
  %985 = vmatpush.msra.mxu0 0.0
  %986 = vmatpush.msra.mxu0 0.0
  %987 = vmatpush.msra.mxu0 0.0
  %988 = vmatpush.msra.mxu0 0.0
  %989 = vmatpush.msra.mxu0 0.0
  %990 = vmatpush.msra.mxu0 0.0
  %991 = vmatpush.msra.mxu0 0.0
  %992 = vmatpush.msra.mxu0 0.0
  %993 = vmatpush.msra.mxu0 0.0
  %994 = vmatpush.msra.mxu0 0.0
  %995 = vmatpush.msra.mxu0 0.0
  %996 = vmatpush.msra.mxu0 0.0
  %997 = vmatpush.msra.mxu0 0.0
  %998 = vmatpush.msra.mxu0 0.0
  %999 = vmatpush.msra.mxu0 0.0
  %1000 = vmatpush.msra.mxu0 %v981
  %1001 = vmatmul.f32.gmra.mxu0 %v983
  %v1002 = vpop.f32.mrf.mxu0
  %v1003 = vadd.f32 0.0, %v1002
  %1004 = vdwg.mxu0
  %v1005 = vperm.slane %v1003, 0
  %v1006 = vmul.f32 %v878, %v1005
  %v1007 = vmul.f32 %v879, %v1005
  %v1008 = vmul.f32 %v880, %v1005
  %v1009 = vmul.f32 %v881, %v1005
  %v1010 = vmul.f32 %v882, %v1005
  %v1011 = vperm.slane %v1003, 1
  %v1012 = vadd.f32 %v1006, %v1011
  %v1013 = vadd.f32 %v1007, %v1011
  %v1014 = vadd.f32 %v1008, %v1011
  %v1015 = vadd.f32 %v1009, %v1011
  %v1016 = vadd.f32 %v1010, %v1011
  %v1017 = vmax.f32 %v1012, 0.0
  %v1018 = vmax.f32 %v1013, 0.0
  %v1019 = vmax.f32 %v1014, 0.0
  %v1020 = vmax.f32 %v1015, 0.0
  %v1021 = vmax.f32 %v1016, 0.0
  %1022 = vst [vmem:[%s11 - $0x1] sm:$0xfe] %v1017
  %1023 = vst [vmem:[%s11 + $0x7] sm:$0xff] %v1018
  %1024 = vst [vmem:[%s11 + $0xf] sm:$0x1] %v1019
  %1025 = vst [vmem:[%s11 + $0xd] sm:$0xf8] %v1019
  %1026 = vst [vmem:[%s11 + $0x15] sm:$0xff] %v1020
  %1027 = vst [vmem:[%s11 + $0x1d] sm:$0x7] %v1021
  // Predicated region
  $region46: #{up_forward.1} parent=0 // pred_check
    _
  $region47: #{up_forward.1} parent=0 // pred_check_branch
    %1029 = sbr.rel (0) target = $region49
  $region48: #{up_forward.1} parent=0 // pred_region
    _
  $region49: #{up_forward.1} parent=0 // pred_fallthru
    _
  // Predicated region
  $region50: #{up_forward.1} parent=0 // pred_check
    _
  $region51: #{up_forward.1} parent=0 // pred_check_branch
    %1031 = sbr.rel (0) target = $region53
  $region52: #{up_forward.1} parent=0 // pred_region
    _
  $region53: #{up_forward.1} parent=0 // pred_fallthru
    _

</llo_original>
